<compile_context>
chip_gen: v7x
topology: tpu7x:2x2x1
jax: 0.10.0
libtpu: 0.0.40
codegen_flags: <defaults>
</compile_context>

<pallas_src>
import functools
import math

import jax
import jax.numpy as jnp
from jax import lax
from jax.experimental import pallas as pl
from jax.experimental.pallas import tpu as pltpu

EPS = 1e-6       # nn.LayerNorm(eps=1e-6)
NEG_INF = -1e18  # OpenNMT masked_fill value


def _layer_norm(x, g, b):
    # Single-pass statistics: var = E[x^2] - mu^2 (halves the XLU reductions).
    # Clamp var at 0 to avoid NaN from cancellation when activations are large.
    mu = jnp.mean(x, axis=-1, keepdims=True)
    var = jnp.maximum(jnp.mean(x * x, axis=-1, keepdims=True) - mu * mu, 0.0)
    return (x - mu) * lax.rsqrt(var + EPS) * g + b


# --------------------------------------------------------------------------
# Fused encoder-stack kernel.  One grid step == (batch tile, layer index).
# The running activation stays resident in VMEM scratch across the layer axis.
# --------------------------------------------------------------------------
def _encoder_stack_kernel(heads, num_layers,
                          x_ref, bias_ref,
                          g1_ref, b1_ref, wqkv_ref, bqkv_ref,
                          wo_ref, bo_ref,
                          g2_ref, b2_ref,
                          w1_ref, bf1_ref, w2_ref, bf2_ref,
                          lng_ref, lnb_ref,
                          out_ref,
                          act_ref, ctx_ref):
    l = pl.program_id(1)
    TB, S, D = x_ref.shape
    dh = D // heads
    M = TB * S

    @pl.when(l == 0)
    def _():
        # Load this batch tile's embeddings once; residual stream stays f32.
        act_ref[...] = x_ref[...].reshape(M, D).astype(jnp.float32)

    x = act_ref[...]                                  # (M, D) f32 residual

    # Additive key-padding bias, broadcast ONCE per layer (not per head).
    bias_b = jnp.broadcast_to(bias_ref[...], (TB, S, S))   # (TB, S, S)

    # ---- pre-attention LayerNorm ----
    xn = _layer_norm(x, g1_ref[0], b1_ref[0])

    # ---- fused QKV projection (single lane-dense bf16 MXU call, M = TB*S) ----
    qkv = jnp.dot(xn.astype(jnp.bfloat16), wqkv_ref[0],
                  preferred_element_type=jnp.float32) + bqkv_ref[0]   # (M, 3D)
    q = qkv[:, :D]                                    # 1/sqrt(dh) folded into Wq
    k = qkv[:, D:2 * D]
    v = qkv[:, 2 * D:]

    # ---- multi-head self-attention; per-head ctx written into a fixed VMEM
    #      scratch (bounds live ranges, removes the concat relayout) ----------
    for h in range(heads):                            # static unroll over heads
        sl = slice(h * dh, (h + 1) * dh)
        qh = q[:, sl].reshape(TB, S, dh).astype(jnp.bfloat16)
        kh = k[:, sl].reshape(TB, S, dh).astype(jnp.bfloat16)
        vh = v[:, sl].reshape(TB, S, dh).astype(jnp.bfloat16)
        scores = jnp.einsum('bqd,bkd->bqk', qh, kh,
                            preferred_element_type=jnp.float32) + bias_b
        scores = scores - jnp.max(scores, axis=-1, keepdims=True)
        p = jnp.exp(scores)
        denom = jnp.sum(p, axis=-1, keepdims=True)
        p = p * pl.reciprocal(denom, approx=True)     # divide on the EUP slot
        ctx_h = jnp.einsum('bqk,bkd->bqd', p.astype(jnp.bfloat16), vh,
                           preferred_element_type=jnp.float32)
        ctx_ref[:, sl] = ctx_h.reshape(M, dh)

    # single K=D output projection (instead of `heads` K=dh matmuls)
    attn = jnp.dot(ctx_ref[...].astype(jnp.bfloat16), wo_ref[0],
                   preferred_element_type=jnp.float32) + bo_ref[0]

    y = attn + x                                      # residual (dropout == id)

    # ---- PositionwiseFeedForward: pre-LN -> relu(W1) -> W2 -> residual ----
    yn = _layer_norm(y, g2_ref[0], b2_ref[0])
    h1 = jnp.dot(yn.astype(jnp.bfloat16), w1_ref[0],
                 preferred_element_type=jnp.float32) + bf1_ref[0]
    h1 = jnp.maximum(h1, 0.0).astype(jnp.bfloat16)    # halve the live (M,d_ff)
    h2 = jnp.dot(h1, w2_ref[0],
                 preferred_element_type=jnp.float32) + bf2_ref[0]

    act_ref[...] = h2 + y                             # carry to next layer

    # ---- encoder-top LayerNorm fused into the last layer iteration ----
    @pl.when(l == num_layers - 1)
    def _():
        fin = _layer_norm(act_ref[...], lng_ref[...], lnb_ref[...])
        out_ref[...] = fin.reshape(TB, S, D).astype(out_ref.dtype)


# --------------------------------------------------------------------------
# VMEM budget: sized from the actual working set, capped by the physical VMEM
# of the current chip generation (v7x has 64 MiB/TC; v5e/v6e have 128 MiB).
# --------------------------------------------------------------------------
def _vmem_limit_bytes(TB, S, D, d_ff, heads):
    bf16, f32 = 2, 4
    MiB = 1 << 20
    weights = 2 * (D * 3 * D + D * D + 2 * D * d_ff) * bf16        # dbl-buffered
    small = 2 * (10 * D + 2 * d_ff) * f32                          # biases / LN
    io = 2 * 2 * TB * S * D * bf16 + 2 * TB * S * f32              # x/out + bias
    scratch = 2 * TB * S * D * f32                                  # act + ctx
    live = (TB * S * 3 * D * f32                                    # qkv
            + TB * S * S * f32                                      # one head's scores
            + TB * S * d_ff * (f32 + bf16)                          # ffn hidden
            + 4 * TB * S * D * f32)                                 # xn/y/attn/...
    need = weights + small + io + scratch + live
    try:
        info = pltpu.get_tpu_info()
        phys = int(getattr(info, "vmem_capacity_bytes", 64 * MiB))
    except Exception:
        phys = 64 * MiB                                             # conservative
    cap = max(phys - 12 * MiB, 32 * MiB)
    return int(min(max(need + 8 * MiB, 32 * MiB), cap))


# --------------------------------------------------------------------------
# pallas_call wrapper for the whole layer stack.
# --------------------------------------------------------------------------
def transformer_encoder_stack(x, mask_bias, sp, heads, num_layers, batch_tile=4):
    """x: (B, S, D) f32; mask_bias: (B, 1, S) f32 additive bias (-1e18 at pads)."""
    B, S, D = x.shape
    d_ff = sp["w1"].shape[-1]

    # ---- batch tiling: TB sequences per grid step (pad B up if needed) ----
    TB = max(1, min(batch_tile, B))
    Bp = -(-B // TB) * TB
    if Bp != B:
        x = jnp.pad(x, ((0, Bp - B), (0, 0), (0, 0)))
        mask_bias = jnp.pad(mask_bias, ((0, Bp - B), (0, 0), (0, 0)))

    params = [sp["g1"], sp["b1"], sp["wqkv"], sp["bqkv"], sp["wo"], sp["bo"],
              sp["g2"], sp["b2"], sp["w1"], sp["bf1"], sp["w2"], sp["bf2"]]
    layer_specs = [pl.BlockSpec((1,) + p.shape[1:], lambda b, l: (l, 0, 0))
                   for p in params]
    final_specs = [pl.BlockSpec(sp["ln_g"].shape, lambda b, l: (0, 0)),
                   pl.BlockSpec(sp["ln_b"].shape, lambda b, l: (0, 0))]
    in_specs = ([pl.BlockSpec((TB, S, D), lambda b, l: (b, 0, 0)),
                 pl.BlockSpec((TB, 1, S), lambda b, l: (b, 0, 0))]
                + layer_specs + final_specs)

    # Advisory cost estimate so XLA schedules surrounding ops sensibly.
    flops = int(num_layers * (2 * Bp * S * (4 * D * D + 2 * D * d_ff)
                              + 4 * Bp * S * S * D))
    transcendentals = int(num_layers * Bp * heads * S * S)
    weight_bytes = int((4 * D * D + 2 * D * d_ff) * 2 + (10 * D + 2 * d_ff) * 4)
    bytes_accessed = int(num_layers * (Bp // TB) * weight_bytes
                         + 2 * Bp * S * D * 2 + Bp * S * 4)

    out = pl.pallas_call(
        functools.partial(_encoder_stack_kernel, heads, num_layers),
        out_shape=jax.ShapeDtypeStruct((Bp, S, D), jnp.bfloat16),
        grid=(Bp // TB, num_layers),
        in_specs=in_specs,
        out_specs=pl.BlockSpec((TB, S, D), lambda b, l: (b, 0, 0)),
        scratch_shapes=[pltpu.VMEM((TB * S, D), jnp.float32),    # residual stream
                        pltpu.VMEM((TB * S, D), jnp.float32)],   # attention ctx
        compiler_params=pltpu.CompilerParams(
            dimension_semantics=("parallel", "arbitrary"),
            vmem_limit_bytes=_vmem_limit_bytes(TB, S, D, d_ff, heads)),
        cost_estimate=pl.CostEstimate(flops=flops,
                                      transcendentals=transcendentals,
                                      bytes_accessed=bytes_accessed),
    )(x.astype(jnp.bfloat16), mask_bias, *params, sp["ln_g"], sp["ln_b"])
    return out[:B]


# --------------------------------------------------------------------------
# Embeddings (word lookup * sqrt(d_model) + sinusoidal PE) -- plain JAX glue.
# --------------------------------------------------------------------------
def sinusoidal_pe(max_len, dim):
    pos = jnp.arange(max_len, dtype=jnp.float32)[:, None]
    div = jnp.exp(jnp.arange(0, dim, 2, dtype=jnp.float32)
                  * -(math.log(10000.0) / dim))
    pe = jnp.zeros((max_len, dim), jnp.float32)
    pe = pe.at[:, 0::2].set(jnp.sin(pos * div))
    pe = pe.at[:, 1::2].set(jnp.cos(pos * div))
    return pe


def transformer_encoder_forward(src, params, lengths=None):
    """src: (src_len, batch, 1) int32 token ids.  Mirrors the PyTorch forward."""
    S, B, _ = src.shape
    D = params["d_model"]
    ids = src[:, :, 0]                                             # (S, B)
    emb = params["emb_table"][ids] * math.sqrt(D) + params["pe"][:S][:, None, :]
    # emb: (S, B, D); dropout in embeddings is identity (eval mode)

    out = jnp.transpose(emb, (1, 0, 2))                            # (B, S, D)
    words = ids.T                                                  # (B, S)
    pad = (words == params["padding_idx"])
    mask_bias = jnp.where(pad, NEG_INF, 0.0).astype(jnp.float32)[:, None, :]

    out = transformer_encoder_stack(out, mask_bias, params["stack"],
                                    params["heads"], params["num_layers"])

    memory_bank = jnp.transpose(out.astype(jnp.float32), (1, 0, 2))  # (S, B, D)
    return emb, memory_bank, lengths


# --------------------------------------------------------------------------
# Deterministic parameter construction (per-layer weights stacked along L;
# matmul weights in bf16, biases / LN params in f32; 1/sqrt(dh) folded into Wq).
# --------------------------------------------------------------------------
def init_params(key, num_layers, d_model, heads, d_ff, vocab, padding_idx,
                max_len=512):
    dh = d_model // heads
    scale = 1.0 / math.sqrt(dh)

    def nrm(k, shape, s=0.02):
        return (s * jax.random.normal(k, shape)).astype(jnp.float32)

    keys = jax.random.split(key, 2 + num_layers)
    emb_table = nrm(keys[0], (vocab, d_model), 1.0)
    emb_table = emb_table.at[padding_idx].set(0.0)  # nn.Embedding padding_idx row

    g1, b1, wqkv, bqkv, wo, bo = [], [], [], [], [], []
    g2, b2, w1, bf1, w2, bf2 = [], [], [], [], [], []
    for li in range(num_layers):
        lk = jax.random.split(keys[2 + li], 6)
        wq = nrm(lk[0], (d_model, d_model)); bq = jnp.zeros((1, d_model), jnp.float32)
        wk = nrm(lk[1], (d_model, d_model)); bk = jnp.zeros((1, d_model), jnp.float32)
        wv = nrm(lk[2], (d_model, d_model)); bv = jnp.zeros((1, d_model), jnp.float32)
        g1.append(jnp.ones((1, d_model), jnp.float32))
        b1.append(jnp.zeros((1, d_model), jnp.float32))
        wqkv.append(jnp.concatenate([wq * scale, wk, wv], axis=1))   # (D, 3D)
        bqkv.append(jnp.concatenate([bq * scale, bk, bv], axis=1))   # (1, 3D)
        wo.append(nrm(lk[3], (d_model, d_model)))
        bo.append(jnp.zeros((1, d_model), jnp.float32))
        g2.append(jnp.ones((1, d_model), jnp.float32))
        b2.append(jnp.zeros((1, d_model), jnp.float32))
        w1.append(nrm(lk[4], (d_model, d_ff)))
        bf1.append(jnp.zeros((1, d_ff), jnp.float32))
        w2.append(nrm(lk[5], (d_ff, d_model)))
        bf2.append(jnp.zeros((1, d_model), jnp.float32))

    def sf32(xs): return jnp.stack(xs).astype(jnp.float32)
    def sbf16(xs): return jnp.stack(xs).astype(jnp.bfloat16)

    stack = dict(
        g1=sf32(g1), b1=sf32(b1),
        wqkv=sbf16(wqkv), bqkv=sf32(bqkv),
        wo=sbf16(wo), bo=sf32(bo),
        g2=sf32(g2), b2=sf32(b2),
        w1=sbf16(w1), bf1=sf32(bf1),
        w2=sbf16(w2), bf2=sf32(bf2),
        ln_g=jnp.ones((1, d_model), jnp.float32),
        ln_b=jnp.zeros((1, d_model), jnp.float32),
    )
    return dict(
        d_model=d_model, heads=heads, num_layers=num_layers,
        padding_idx=padding_idx,
        emb_table=emb_table,
        pe=sinusoidal_pe(max_len, d_model),
        stack=stack,
    )


if __name__ == "__main__":
    num_layers, d_model, heads, d_ff = 2, 32, 4, 64
    vocab, padding_idx = 50, 1
    S, B = 8, 2

    key = jax.random.PRNGKey(0)
    kp, kt = jax.random.split(key)
    params = init_params(kp, num_layers, d_model, heads, d_ff, vocab, padding_idx)

    ids = jax.random.randint(kt, (S, B), 2, vocab, dtype=jnp.int32)
    ids = ids.at[S - 2:, 1].set(padding_idx)        # pad the tail of batch item 1
    src = ids[:, :, None]                           # (src_len, batch, nfeat=1)
    lengths = jnp.array([S, S - 2], dtype=jnp.int32)

    emb, memory_bank, lens = transformer_encoder_forward(src, params, lengths)
    jax.block_until_ready(memory_bank)

    assert emb.shape == (S, B, d_model)
    assert memory_bank.shape == (S, B, d_model)
    print("KERNEL_OK")
</pallas_src>

<mosaic_0001>
module attributes {stable_mosaic.version = 11 : i64} {
  func.func @_encoder_stack_kernel(%arg0: i32, %arg1: i32, %arg2: memref<2x8x32xbf16, #tpu.memory_space<vmem>>, %arg3: memref<2x1x8xf32, #tpu.memory_space<vmem>>, %arg4: memref<1x1x32xf32, #tpu.memory_space<vmem>>, %arg5: memref<1x1x32xf32, #tpu.memory_space<vmem>>, %arg6: memref<1x32x96xbf16, #tpu.memory_space<vmem>>, %arg7: memref<1x1x96xf32, #tpu.memory_space<vmem>>, %arg8: memref<1x32x32xbf16, #tpu.memory_space<vmem>>, %arg9: memref<1x1x32xf32, #tpu.memory_space<vmem>>, %arg10: memref<1x1x32xf32, #tpu.memory_space<vmem>>, %arg11: memref<1x1x32xf32, #tpu.memory_space<vmem>>, %arg12: memref<1x32x64xbf16, #tpu.memory_space<vmem>>, %arg13: memref<1x1x64xf32, #tpu.memory_space<vmem>>, %arg14: memref<1x64x32xbf16, #tpu.memory_space<vmem>>, %arg15: memref<1x1x32xf32, #tpu.memory_space<vmem>>, %arg16: memref<1x32xf32, #tpu.memory_space<vmem>>, %arg17: memref<1x32xf32, #tpu.memory_space<vmem>>, %arg18: memref<2x8x32xbf16, #tpu.memory_space<vmem>>, %arg19: memref<16x32xf32, #tpu.memory_space<vmem>>, %arg20: memref<16x32xf32, #tpu.memory_space<vmem>>) attributes {dimension_semantics = [#tpu.dimension_semantics<parallel>, #tpu.dimension_semantics<arbitrary>], iteration_bounds = array<i64: 1, 2>, scalar_prefetch = 0 : i64, scratch_operands = 2 : i64, tpu.core_type = #tpu.core_type<tc>, window_params = [{transform_indices = @transform_0, window_bounds = array<i64: 2, 8, 32>}, {transform_indices = @transform_1, window_bounds = array<i64: 2, 1, 8>}, {transform_indices = @transform_2, window_bounds = array<i64: 1, 1, 32>}, {transform_indices = @transform_3, window_bounds = array<i64: 1, 1, 32>}, {transform_indices = @transform_4, window_bounds = array<i64: 1, 32, 96>}, {transform_indices = @transform_5, window_bounds = array<i64: 1, 1, 96>}, {transform_indices = @transform_6, window_bounds = array<i64: 1, 32, 32>}, {transform_indices = @transform_7, window_bounds = array<i64: 1, 1, 32>}, {transform_indices = @transform_8, window_bounds = array<i64: 1, 1, 32>}, {transform_indices = @transform_9, window_bounds = array<i64: 1, 1, 32>}, {transform_indices = @transform_10, window_bounds = array<i64: 1, 32, 64>}, {transform_indices = @transform_11, window_bounds = array<i64: 1, 1, 64>}, {transform_indices = @transform_12, window_bounds = array<i64: 1, 64, 32>}, {transform_indices = @transform_13, window_bounds = array<i64: 1, 1, 32>}, {pipeline_mode = #tpu.pipeline_mode<synchronous>, transform_indices = @transform_14, window_bounds = array<i64: 1, 32>}, {pipeline_mode = #tpu.pipeline_mode<synchronous>, transform_indices = @transform_15, window_bounds = array<i64: 1, 32>}, {transform_indices = @transform_16, window_bounds = array<i64: 2, 8, 32>}]} {
    %c0_i32 = arith.constant 0 : i32
    %0 = arith.cmpi eq, %arg1, %c0_i32 : i32
    %1 = arith.extui %0 : i1 to i32
    %c0_i32_0 = arith.constant 0 : i32
    %2 = arith.cmpi ne, %1, %c0_i32_0 : i32
    scf.if %2 {
      %c0_83 = arith.constant 0 : index
      %c0_84 = arith.constant 0 : index
      %c0_85 = arith.constant 0 : index
      %207 = vector.load %arg2[%c0_83, %c0_84, %c0_85] : memref<2x8x32xbf16, #tpu.memory_space<vmem>>, vector<2x8x32xbf16>
      %208 = vector.shape_cast %207 : vector<2x8x32xbf16> to vector<16x32xbf16>
      %209 = arith.extf %208 : vector<16x32xbf16> to vector<16x32xf32>
      %c0_86 = arith.constant 0 : index
      %c0_87 = arith.constant 0 : index
      %210 = vector.load %arg19[%c0_86, %c0_87] : memref<16x32xf32, #tpu.memory_space<vmem>>, vector<16x32xf32>
      tpu.vector_store %arg19[%c0_86, %c0_87], %209 {strides = array<i32>} : memref<16x32xf32, #tpu.memory_space<vmem>>, vector<16x32xf32>,
    } else {
    }
    %c0 = arith.constant 0 : index
    %c0_1 = arith.constant 0 : index
    %3 = vector.load %arg19[%c0, %c0_1] : memref<16x32xf32, #tpu.memory_space<vmem>>, vector<16x32xf32>
    %c0_2 = arith.constant 0 : index
    %c0_3 = arith.constant 0 : index
    %c0_4 = arith.constant 0 : index
    %4 = vector.load %arg3[%c0_2, %c0_3, %c0_4] : memref<2x1x8xf32, #tpu.memory_space<vmem>>, vector<2x1x8xf32>
    %5 = vector.shape_cast %4 : vector<2x1x8xf32> to vector<2x1x8xf32>
    %6 = vector.broadcast %5 : vector<2x1x8xf32> to vector<2x8x8xf32>
    %c0_5 = arith.constant 0 : index
    %c0_6 = arith.constant 0 : index
    %c0_7 = arith.constant 0 : index
    %7 = vector.load %arg4[%c0_5, %c0_6, %c0_7] : memref<1x1x32xf32, #tpu.memory_space<vmem>>, vector<1x1x32xf32>
    %8 = vector.shape_cast %7 : vector<1x1x32xf32> to vector<1x32xf32>
    %c0_8 = arith.constant 0 : index
    %c0_9 = arith.constant 0 : index
    %c0_10 = arith.constant 0 : index
    %9 = vector.load %arg5[%c0_8, %c0_9, %c0_10] : memref<1x1x32xf32, #tpu.memory_space<vmem>>, vector<1x1x32xf32>
    %10 = vector.shape_cast %9 : vector<1x1x32xf32> to vector<1x32xf32>
    %cst = arith.constant dense<0.000000e+00> : vector<16xf32>
    %11 = vector.multi_reduction <add>, %3, %cst [1] : vector<16x32xf32> to vector<16xf32>
    %12 = vector.shape_cast %11 : vector<16xf32> to vector<16x1xf32>
    %cst_11 = arith.constant 3.200000e+01 : f32
    %13 = vector.broadcast %cst_11 : f32 to vector<16x1xf32>
    %14 = arith.divf %12, %13 : vector<16x1xf32>
    %15 = arith.mulf %3, %3 : vector<16x32xf32>
    %cst_12 = arith.constant dense<0.000000e+00> : vector<16xf32>
    %16 = vector.multi_reduction <add>, %15, %cst_12 [1] : vector<16x32xf32> to vector<16xf32>
    %17 = vector.shape_cast %16 : vector<16xf32> to vector<16x1xf32>
    %cst_13 = arith.constant 3.200000e+01 : f32
    %18 = vector.broadcast %cst_13 : f32 to vector<16x1xf32>
    %19 = arith.divf %17, %18 : vector<16x1xf32>
    %20 = arith.mulf %14, %14 : vector<16x1xf32>
    %21 = arith.subf %19, %20 : vector<16x1xf32>
    %cst_14 = arith.constant 0.000000e+00 : f32
    %22 = vector.broadcast %cst_14 : f32 to vector<16x1xf32>
    %23 = arith.maximumf %21, %22 : vector<16x1xf32>
    %24 = vector.broadcast %14 : vector<16x1xf32> to vector<16x32xf32>
    %25 = arith.subf %3, %24 : vector<16x32xf32>
    %cst_15 = arith.constant 9.99999997E-7 : f32
    %26 = vector.broadcast %cst_15 : f32 to vector<16x1xf32>
    %27 = arith.addf %23, %26 : vector<16x1xf32>
    %28 = math.rsqrt %27 : vector<16x1xf32>
    %29 = vector.broadcast %28 : vector<16x1xf32> to vector<16x32xf32>
    %30 = arith.mulf %25, %29 : vector<16x32xf32>
    %31 = vector.broadcast %8 : vector<1x32xf32> to vector<16x32xf32>
    %32 = arith.mulf %30, %31 : vector<16x32xf32>
    %33 = vector.broadcast %10 : vector<1x32xf32> to vector<16x32xf32>
    %34 = arith.addf %32, %33 : vector<16x32xf32>
    %35 = arith.truncf %34 : vector<16x32xf32> to vector<16x32xbf16>
    %c0_16 = arith.constant 0 : index
    %c0_17 = arith.constant 0 : index
    %c0_18 = arith.constant 0 : index
    %36 = vector.load %arg6[%c0_16, %c0_17, %c0_18] : memref<1x32x96xbf16, #tpu.memory_space<vmem>>, vector<1x32x96xbf16>
    %37 = vector.shape_cast %36 : vector<1x32x96xbf16> to vector<32x96xbf16>
    %cst_19 = arith.constant dense<0.000000e+00> : vector<16x96xf32>
    %38 = tpu.matmul %35, %37, %cst_19 {dimension_numbers = #tpu.dot_dimension_numbers<[1], [0], [0], [1], [0, 0, 1, 1], [], []>} : vector<16x32xbf16>, vector<32x96xbf16>, vector<16x96xf32> -> vector<16x96xf32>
    %c0_20 = arith.constant 0 : index
    %c0_21 = arith.constant 0 : index
    %c0_22 = arith.constant 0 : index
    %39 = vector.load %arg7[%c0_20, %c0_21, %c0_22] : memref<1x1x96xf32, #tpu.memory_space<vmem>>, vector<1x1x96xf32>
    %40 = vector.shape_cast %39 : vector<1x1x96xf32> to vector<1x96xf32>
    %41 = vector.broadcast %40 : vector<1x96xf32> to vector<16x96xf32>
    %42 = arith.addf %38, %41 : vector<16x96xf32>
    %43 = vector.extract_strided_slice %42 {offsets = [0, 0], sizes = [16, 32], strides = [1, 1]} : vector<16x96xf32> to vector<16x32xf32>
    %44 = vector.extract_strided_slice %42 {offsets = [0, 32], sizes = [16, 32], strides = [1, 1]} : vector<16x96xf32> to vector<16x32xf32>
    %45 = vector.extract_strided_slice %42 {offsets = [0, 64], sizes = [16, 32], strides = [1, 1]} : vector<16x96xf32> to vector<16x32xf32>
    %46 = vector.extract_strided_slice %43 {offsets = [0, 0], sizes = [16, 8], strides = [1, 1]} : vector<16x32xf32> to vector<16x8xf32>
    %47 = vector.shape_cast %46 : vector<16x8xf32> to vector<2x8x8xf32>
    %48 = arith.truncf %47 : vector<2x8x8xf32> to vector<2x8x8xbf16>
    %49 = vector.extract_strided_slice %44 {offsets = [0, 0], sizes = [16, 8], strides = [1, 1]} : vector<16x32xf32> to vector<16x8xf32>
    %50 = vector.shape_cast %49 : vector<16x8xf32> to vector<2x8x8xf32>
    %51 = arith.truncf %50 : vector<2x8x8xf32> to vector<2x8x8xbf16>
    %52 = vector.extract_strided_slice %45 {offsets = [0, 0], sizes = [16, 8], strides = [1, 1]} : vector<16x32xf32> to vector<16x8xf32>
    %53 = vector.shape_cast %52 : vector<16x8xf32> to vector<2x8x8xf32>
    %54 = arith.truncf %53 : vector<2x8x8xf32> to vector<2x8x8xbf16>
    "tpu.trace_start"() <{level = 10 : i32, message = "bqd,bkd->bqk"}> : () -> ()
    %cst_23 = arith.constant dense<0.000000e+00> : vector<2x8x8xf32>
    %55 = tpu.matmul %48, %51, %cst_23 {dimension_numbers = #tpu.dot_dimension_numbers<[2], [2], [1], [1], [0, 0, 0, 1, 1, 1], [0], [0]>} : vector<2x8x8xbf16>, vector<2x8x8xbf16>, vector<2x8x8xf32> -> vector<2x8x8xf32>
    "tpu.trace_stop"() : () -> ()
    %56 = arith.addf %55, %6 : vector<2x8x8xf32>
    %cst_24 = arith.constant dense<0xFF800000> : vector<2x8xf32>
    %57 = vector.multi_reduction <maximumf>, %56, %cst_24 [2] : vector<2x8x8xf32> to vector<2x8xf32>
    %58 = vector.shape_cast %57 : vector<2x8xf32> to vector<2x8x1xf32>
    %59 = vector.broadcast %58 : vector<2x8x1xf32> to vector<2x8x8xf32>
    %60 = arith.subf %56, %59 : vector<2x8x8xf32>
    %61 = math.exp %60 : vector<2x8x8xf32>
    %cst_25 = arith.constant dense<0.000000e+00> : vector<2x8xf32>
    %62 = vector.multi_reduction <add>, %61, %cst_25 [2] : vector<2x8x8xf32> to vector<2x8xf32>
    %63 = vector.shape_cast %62 : vector<2x8xf32> to vector<2x8x1xf32>
    %64 = tpu.reciprocal %63 {approx = true} : vector<2x8x1xf32> -> vector<2x8x1xf32>
    %65 = vector.broadcast %64 : vector<2x8x1xf32> to vector<2x8x8xf32>
    %66 = arith.mulf %61, %65 : vector<2x8x8xf32>
    %67 = arith.truncf %66 : vector<2x8x8xf32> to vector<2x8x8xbf16>
    "tpu.trace_start"() <{level = 10 : i32, message = "bqk,bkd->bqd"}> : () -> ()
    %cst_26 = arith.constant dense<0.000000e+00> : vector<2x8x8xf32>
    %68 = tpu.matmul %67, %54, %cst_26 {dimension_numbers = #tpu.dot_dimension_numbers<[2], [1], [1], [2], [0, 0, 0, 1, 1, 2], [0], [0]>} : vector<2x8x8xbf16>, vector<2x8x8xbf16>, vector<2x8x8xf32> -> vector<2x8x8xf32>
    "tpu.trace_stop"() : () -> ()
    %69 = vector.shape_cast %68 : vector<2x8x8xf32> to vector<16x8xf32>
    %c0_27 = arith.constant 0 : index
    %c0_28 = arith.constant 0 : index
    %70 = vector.load %arg20[%c0_27, %c0_28] : memref<16x32xf32, #tpu.memory_space<vmem>>, vector<16x8xf32>
    tpu.vector_store %arg20[%c0_27, %c0_28], %69 {strides = array<i32>} : memref<16x32xf32, #tpu.memory_space<vmem>>, vector<16x8xf32>,
    %71 = vector.extract_strided_slice %43 {offsets = [0, 8], sizes = [16, 8], strides = [1, 1]} : vector<16x32xf32> to vector<16x8xf32>
    %72 = vector.shape_cast %71 : vector<16x8xf32> to vector<2x8x8xf32>
    %73 = arith.truncf %72 : vector<2x8x8xf32> to vector<2x8x8xbf16>
    %74 = vector.extract_strided_slice %44 {offsets = [0, 8], sizes = [16, 8], strides = [1, 1]} : vector<16x32xf32> to vector<16x8xf32>
    %75 = vector.shape_cast %74 : vector<16x8xf32> to vector<2x8x8xf32>
    %76 = arith.truncf %75 : vector<2x8x8xf32> to vector<2x8x8xbf16>
    %77 = vector.extract_strided_slice %45 {offsets = [0, 8], sizes = [16, 8], strides = [1, 1]} : vector<16x32xf32> to vector<16x8xf32>
    %78 = vector.shape_cast %77 : vector<16x8xf32> to vector<2x8x8xf32>
    %79 = arith.truncf %78 : vector<2x8x8xf32> to vector<2x8x8xbf16>
    "tpu.trace_start"() <{level = 10 : i32, message = "bqd,bkd->bqk"}> : () -> ()
    %cst_29 = arith.constant dense<0.000000e+00> : vector<2x8x8xf32>
    %80 = tpu.matmul %73, %76, %cst_29 {dimension_numbers = #tpu.dot_dimension_numbers<[2], [2], [1], [1], [0, 0, 0, 1, 1, 1], [0], [0]>} : vector<2x8x8xbf16>, vector<2x8x8xbf16>, vector<2x8x8xf32> -> vector<2x8x8xf32>
    "tpu.trace_stop"() : () -> ()
    %81 = arith.addf %80, %6 : vector<2x8x8xf32>
    %cst_30 = arith.constant dense<0xFF800000> : vector<2x8xf32>
    %82 = vector.multi_reduction <maximumf>, %81, %cst_30 [2] : vector<2x8x8xf32> to vector<2x8xf32>
    %83 = vector.shape_cast %82 : vector<2x8xf32> to vector<2x8x1xf32>
    %84 = vector.broadcast %83 : vector<2x8x1xf32> to vector<2x8x8xf32>
    %85 = arith.subf %81, %84 : vector<2x8x8xf32>
    %86 = math.exp %85 : vector<2x8x8xf32>
    %cst_31 = arith.constant dense<0.000000e+00> : vector<2x8xf32>
    %87 = vector.multi_reduction <add>, %86, %cst_31 [2] : vector<2x8x8xf32> to vector<2x8xf32>
    %88 = vector.shape_cast %87 : vector<2x8xf32> to vector<2x8x1xf32>
    %89 = tpu.reciprocal %88 {approx = true} : vector<2x8x1xf32> -> vector<2x8x1xf32>
    %90 = vector.broadcast %89 : vector<2x8x1xf32> to vector<2x8x8xf32>
    %91 = arith.mulf %86, %90 : vector<2x8x8xf32>
    %92 = arith.truncf %91 : vector<2x8x8xf32> to vector<2x8x8xbf16>
    "tpu.trace_start"() <{level = 10 : i32, message = "bqk,bkd->bqd"}> : () -> ()
    %cst_32 = arith.constant dense<0.000000e+00> : vector<2x8x8xf32>
    %93 = tpu.matmul %92, %79, %cst_32 {dimension_numbers = #tpu.dot_dimension_numbers<[2], [1], [1], [2], [0, 0, 0, 1, 1, 2], [0], [0]>} : vector<2x8x8xbf16>, vector<2x8x8xbf16>, vector<2x8x8xf32> -> vector<2x8x8xf32>
    "tpu.trace_stop"() : () -> ()
    %94 = vector.shape_cast %93 : vector<2x8x8xf32> to vector<16x8xf32>
    %c0_33 = arith.constant 0 : index
    %c8 = arith.constant 8 : index
    %95 = vector.load %arg20[%c0_33, %c8] : memref<16x32xf32, #tpu.memory_space<vmem>>, vector<16x8xf32>
    tpu.vector_store %arg20[%c0_33, %c8], %94 {strides = array<i32>} : memref<16x32xf32, #tpu.memory_space<vmem>>, vector<16x8xf32>,
    %96 = vector.extract_strided_slice %43 {offsets = [0, 16], sizes = [16, 8], strides = [1, 1]} : vector<16x32xf32> to vector<16x8xf32>
    %97 = vector.shape_cast %96 : vector<16x8xf32> to vector<2x8x8xf32>
    %98 = arith.truncf %97 : vector<2x8x8xf32> to vector<2x8x8xbf16>
    %99 = vector.extract_strided_slice %44 {offsets = [0, 16], sizes = [16, 8], strides = [1, 1]} : vector<16x32xf32> to vector<16x8xf32>
    %100 = vector.shape_cast %99 : vector<16x8xf32> to vector<2x8x8xf32>
    %101 = arith.truncf %100 : vector<2x8x8xf32> to vector<2x8x8xbf16>
    %102 = vector.extract_strided_slice %45 {offsets = [0, 16], sizes = [16, 8], strides = [1, 1]} : vector<16x32xf32> to vector<16x8xf32>
    %103 = vector.shape_cast %102 : vector<16x8xf32> to vector<2x8x8xf32>
    %104 = arith.truncf %103 : vector<2x8x8xf32> to vector<2x8x8xbf16>
    "tpu.trace_start"() <{level = 10 : i32, message = "bqd,bkd->bqk"}> : () -> ()
    %cst_34 = arith.constant dense<0.000000e+00> : vector<2x8x8xf32>
    %105 = tpu.matmul %98, %101, %cst_34 {dimension_numbers = #tpu.dot_dimension_numbers<[2], [2], [1], [1], [0, 0, 0, 1, 1, 1], [0], [0]>} : vector<2x8x8xbf16>, vector<2x8x8xbf16>, vector<2x8x8xf32> -> vector<2x8x8xf32>
    "tpu.trace_stop"() : () -> ()
    %106 = arith.addf %105, %6 : vector<2x8x8xf32>
    %cst_35 = arith.constant dense<0xFF800000> : vector<2x8xf32>
    %107 = vector.multi_reduction <maximumf>, %106, %cst_35 [2] : vector<2x8x8xf32> to vector<2x8xf32>
    %108 = vector.shape_cast %107 : vector<2x8xf32> to vector<2x8x1xf32>
    %109 = vector.broadcast %108 : vector<2x8x1xf32> to vector<2x8x8xf32>
    %110 = arith.subf %106, %109 : vector<2x8x8xf32>
    %111 = math.exp %110 : vector<2x8x8xf32>
    %cst_36 = arith.constant dense<0.000000e+00> : vector<2x8xf32>
    %112 = vector.multi_reduction <add>, %111, %cst_36 [2] : vector<2x8x8xf32> to vector<2x8xf32>
    %113 = vector.shape_cast %112 : vector<2x8xf32> to vector<2x8x1xf32>
    %114 = tpu.reciprocal %113 {approx = true} : vector<2x8x1xf32> -> vector<2x8x1xf32>
    %115 = vector.broadcast %114 : vector<2x8x1xf32> to vector<2x8x8xf32>
    %116 = arith.mulf %111, %115 : vector<2x8x8xf32>
    %117 = arith.truncf %116 : vector<2x8x8xf32> to vector<2x8x8xbf16>
    "tpu.trace_start"() <{level = 10 : i32, message = "bqk,bkd->bqd"}> : () -> ()
    %cst_37 = arith.constant dense<0.000000e+00> : vector<2x8x8xf32>
    %118 = tpu.matmul %117, %104, %cst_37 {dimension_numbers = #tpu.dot_dimension_numbers<[2], [1], [1], [2], [0, 0, 0, 1, 1, 2], [0], [0]>} : vector<2x8x8xbf16>, vector<2x8x8xbf16>, vector<2x8x8xf32> -> vector<2x8x8xf32>
    "tpu.trace_stop"() : () -> ()
    %119 = vector.shape_cast %118 : vector<2x8x8xf32> to vector<16x8xf32>
    %c0_38 = arith.constant 0 : index
    %c16 = arith.constant 16 : index
    %120 = vector.load %arg20[%c0_38, %c16] : memref<16x32xf32, #tpu.memory_space<vmem>>, vector<16x8xf32>
    tpu.vector_store %arg20[%c0_38, %c16], %119 {strides = array<i32>} : memref<16x32xf32, #tpu.memory_space<vmem>>, vector<16x8xf32>,
    %121 = vector.extract_strided_slice %43 {offsets = [0, 24], sizes = [16, 8], strides = [1, 1]} : vector<16x32xf32> to vector<16x8xf32>
    %122 = vector.shape_cast %121 : vector<16x8xf32> to vector<2x8x8xf32>
    %123 = arith.truncf %122 : vector<2x8x8xf32> to vector<2x8x8xbf16>
    %124 = vector.extract_strided_slice %44 {offsets = [0, 24], sizes = [16, 8], strides = [1, 1]} : vector<16x32xf32> to vector<16x8xf32>
    %125 = vector.shape_cast %124 : vector<16x8xf32> to vector<2x8x8xf32>
    %126 = arith.truncf %125 : vector<2x8x8xf32> to vector<2x8x8xbf16>
    %127 = vector.extract_strided_slice %45 {offsets = [0, 24], sizes = [16, 8], strides = [1, 1]} : vector<16x32xf32> to vector<16x8xf32>
    %128 = vector.shape_cast %127 : vector<16x8xf32> to vector<2x8x8xf32>
    %129 = arith.truncf %128 : vector<2x8x8xf32> to vector<2x8x8xbf16>
    "tpu.trace_start"() <{level = 10 : i32, message = "bqd,bkd->bqk"}> : () -> ()
    %cst_39 = arith.constant dense<0.000000e+00> : vector<2x8x8xf32>
    %130 = tpu.matmul %123, %126, %cst_39 {dimension_numbers = #tpu.dot_dimension_numbers<[2], [2], [1], [1], [0, 0, 0, 1, 1, 1], [0], [0]>} : vector<2x8x8xbf16>, vector<2x8x8xbf16>, vector<2x8x8xf32> -> vector<2x8x8xf32>
    "tpu.trace_stop"() : () -> ()
    %131 = arith.addf %130, %6 : vector<2x8x8xf32>
    %cst_40 = arith.constant dense<0xFF800000> : vector<2x8xf32>
    %132 = vector.multi_reduction <maximumf>, %131, %cst_40 [2] : vector<2x8x8xf32> to vector<2x8xf32>
    %133 = vector.shape_cast %132 : vector<2x8xf32> to vector<2x8x1xf32>
    %134 = vector.broadcast %133 : vector<2x8x1xf32> to vector<2x8x8xf32>
    %135 = arith.subf %131, %134 : vector<2x8x8xf32>
    %136 = math.exp %135 : vector<2x8x8xf32>
    %cst_41 = arith.constant dense<0.000000e+00> : vector<2x8xf32>
    %137 = vector.multi_reduction <add>, %136, %cst_41 [2] : vector<2x8x8xf32> to vector<2x8xf32>
    %138 = vector.shape_cast %137 : vector<2x8xf32> to vector<2x8x1xf32>
    %139 = tpu.reciprocal %138 {approx = true} : vector<2x8x1xf32> -> vector<2x8x1xf32>
    %140 = vector.broadcast %139 : vector<2x8x1xf32> to vector<2x8x8xf32>
    %141 = arith.mulf %136, %140 : vector<2x8x8xf32>
    %142 = arith.truncf %141 : vector<2x8x8xf32> to vector<2x8x8xbf16>
    "tpu.trace_start"() <{level = 10 : i32, message = "bqk,bkd->bqd"}> : () -> ()
    %cst_42 = arith.constant dense<0.000000e+00> : vector<2x8x8xf32>
    %143 = tpu.matmul %142, %129, %cst_42 {dimension_numbers = #tpu.dot_dimension_numbers<[2], [1], [1], [2], [0, 0, 0, 1, 1, 2], [0], [0]>} : vector<2x8x8xbf16>, vector<2x8x8xbf16>, vector<2x8x8xf32> -> vector<2x8x8xf32>
    "tpu.trace_stop"() : () -> ()
    %144 = vector.shape_cast %143 : vector<2x8x8xf32> to vector<16x8xf32>
    %c0_43 = arith.constant 0 : index
    %c24 = arith.constant 24 : index
    %145 = vector.load %arg20[%c0_43, %c24] : memref<16x32xf32, #tpu.memory_space<vmem>>, vector<16x8xf32>
    tpu.vector_store %arg20[%c0_43, %c24], %144 {strides = array<i32>} : memref<16x32xf32, #tpu.memory_space<vmem>>, vector<16x8xf32>,
    %c0_44 = arith.constant 0 : index
    %c0_45 = arith.constant 0 : index
    %146 = vector.load %arg20[%c0_44, %c0_45] : memref<16x32xf32, #tpu.memory_space<vmem>>, vector<16x32xf32>
    %147 = arith.truncf %146 : vector<16x32xf32> to vector<16x32xbf16>
    %c0_46 = arith.constant 0 : index
    %c0_47 = arith.constant 0 : index
    %c0_48 = arith.constant 0 : index
    %148 = vector.load %arg8[%c0_46, %c0_47, %c0_48] : memref<1x32x32xbf16, #tpu.memory_space<vmem>>, vector<1x32x32xbf16>
    %149 = vector.shape_cast %148 : vector<1x32x32xbf16> to vector<32x32xbf16>
    %cst_49 = arith.constant dense<0.000000e+00> : vector<16x32xf32>
    %150 = tpu.matmul %147, %149, %cst_49 {dimension_numbers = #tpu.dot_dimension_numbers<[1], [0], [0], [1], [0, 0, 1, 1], [], []>} : vector<16x32xbf16>, vector<32x32xbf16>, vector<16x32xf32> -> vector<16x32xf32>
    %c0_50 = arith.constant 0 : index
    %c0_51 = arith.constant 0 : index
    %c0_52 = arith.constant 0 : index
    %151 = vector.load %arg9[%c0_50, %c0_51, %c0_52] : memref<1x1x32xf32, #tpu.memory_space<vmem>>, vector<1x1x32xf32>
    %152 = vector.shape_cast %151 : vector<1x1x32xf32> to vector<1x32xf32>
    %153 = vector.broadcast %152 : vector<1x32xf32> to vector<16x32xf32>
    %154 = arith.addf %150, %153 : vector<16x32xf32>
    %155 = arith.addf %154, %3 : vector<16x32xf32>
    %c0_53 = arith.constant 0 : index
    %c0_54 = arith.constant 0 : index
    %c0_55 = arith.constant 0 : index
    %156 = vector.load %arg10[%c0_53, %c0_54, %c0_55] : memref<1x1x32xf32, #tpu.memory_space<vmem>>, vector<1x1x32xf32>
    %157 = vector.shape_cast %156 : vector<1x1x32xf32> to vector<1x32xf32>
    %c0_56 = arith.constant 0 : index
    %c0_57 = arith.constant 0 : index
    %c0_58 = arith.constant 0 : index
    %158 = vector.load %arg11[%c0_56, %c0_57, %c0_58] : memref<1x1x32xf32, #tpu.memory_space<vmem>>, vector<1x1x32xf32>
    %159 = vector.shape_cast %158 : vector<1x1x32xf32> to vector<1x32xf32>
    %cst_59 = arith.constant dense<0.000000e+00> : vector<16xf32>
    %160 = vector.multi_reduction <add>, %155, %cst_59 [1] : vector<16x32xf32> to vector<16xf32>
    %161 = vector.shape_cast %160 : vector<16xf32> to vector<16x1xf32>
    %cst_60 = arith.constant 3.200000e+01 : f32
    %162 = vector.broadcast %cst_60 : f32 to vector<16x1xf32>
    %163 = arith.divf %161, %162 : vector<16x1xf32>
    %164 = arith.mulf %155, %155 : vector<16x32xf32>
    %cst_61 = arith.constant dense<0.000000e+00> : vector<16xf32>
    %165 = vector.multi_reduction <add>, %164, %cst_61 [1] : vector<16x32xf32> to vector<16xf32>
    %166 = vector.shape_cast %165 : vector<16xf32> to vector<16x1xf32>
    %cst_62 = arith.constant 3.200000e+01 : f32
    %167 = vector.broadcast %cst_62 : f32 to vector<16x1xf32>
    %168 = arith.divf %166, %167 : vector<16x1xf32>
    %169 = arith.mulf %163, %163 : vector<16x1xf32>
    %170 = arith.subf %168, %169 : vector<16x1xf32>
    %cst_63 = arith.constant 0.000000e+00 : f32
    %171 = vector.broadcast %cst_63 : f32 to vector<16x1xf32>
    %172 = arith.maximumf %170, %171 : vector<16x1xf32>
    %173 = vector.broadcast %163 : vector<16x1xf32> to vector<16x32xf32>
    %174 = arith.subf %155, %173 : vector<16x32xf32>
    %cst_64 = arith.constant 9.99999997E-7 : f32
    %175 = vector.broadcast %cst_64 : f32 to vector<16x1xf32>
    %176 = arith.addf %172, %175 : vector<16x1xf32>
    %177 = math.rsqrt %176 : vector<16x1xf32>
    %178 = vector.broadcast %177 : vector<16x1xf32> to vector<16x32xf32>
    %179 = arith.mulf %174, %178 : vector<16x32xf32>
    %180 = vector.broadcast %157 : vector<1x32xf32> to vector<16x32xf32>
    %181 = arith.mulf %179, %180 : vector<16x32xf32>
    %182 = vector.broadcast %159 : vector<1x32xf32> to vector<16x32xf32>
    %183 = arith.addf %181, %182 : vector<16x32xf32>
    %184 = arith.truncf %183 : vector<16x32xf32> to vector<16x32xbf16>
    %c0_65 = arith.constant 0 : index
    %c0_66 = arith.constant 0 : index
    %c0_67 = arith.constant 0 : index
    %185 = vector.load %arg12[%c0_65, %c0_66, %c0_67] : memref<1x32x64xbf16, #tpu.memory_space<vmem>>, vector<1x32x64xbf16>
    %186 = vector.shape_cast %185 : vector<1x32x64xbf16> to vector<32x64xbf16>
    %cst_68 = arith.constant dense<0.000000e+00> : vector<16x64xf32>
    %187 = tpu.matmul %184, %186, %cst_68 {dimension_numbers = #tpu.dot_dimension_numbers<[1], [0], [0], [1], [0, 0, 1, 1], [], []>} : vector<16x32xbf16>, vector<32x64xbf16>, vector<16x64xf32> -> vector<16x64xf32>
    %c0_69 = arith.constant 0 : index
    %c0_70 = arith.constant 0 : index
    %c0_71 = arith.constant 0 : index
    %188 = vector.load %arg13[%c0_69, %c0_70, %c0_71] : memref<1x1x64xf32, #tpu.memory_space<vmem>>, vector<1x1x64xf32>
    %189 = vector.shape_cast %188 : vector<1x1x64xf32> to vector<1x64xf32>
    %190 = vector.broadcast %189 : vector<1x64xf32> to vector<16x64xf32>
    %191 = arith.addf %187, %190 : vector<16x64xf32>
    %cst_72 = arith.constant 0.000000e+00 : f32
    %192 = vector.broadcast %cst_72 : f32 to vector<16x64xf32>
    %193 = arith.maximumf %191, %192 : vector<16x64xf32>
    %194 = arith.truncf %193 : vector<16x64xf32> to vector<16x64xbf16>
    %c0_73 = arith.constant 0 : index
    %c0_74 = arith.constant 0 : index
    %c0_75 = arith.constant 0 : index
    %195 = vector.load %arg14[%c0_73, %c0_74, %c0_75] : memref<1x64x32xbf16, #tpu.memory_space<vmem>>, vector<1x64x32xbf16>
    %196 = vector.shape_cast %195 : vector<1x64x32xbf16> to vector<64x32xbf16>
    %cst_76 = arith.constant dense<0.000000e+00> : vector<16x32xf32>
    %197 = tpu.matmul %194, %196, %cst_76 {dimension_numbers = #tpu.dot_dimension_numbers<[1], [0], [0], [1], [0, 0, 1, 1], [], []>} : vector<16x64xbf16>, vector<64x32xbf16>, vector<16x32xf32> -> vector<16x32xf32>
    %c0_77 = arith.constant 0 : index
    %c0_78 = arith.constant 0 : index
    %c0_79 = arith.constant 0 : index
    %198 = vector.load %arg15[%c0_77, %c0_78, %c0_79] : memref<1x1x32xf32, #tpu.memory_space<vmem>>, vector<1x1x32xf32>
    %199 = vector.shape_cast %198 : vector<1x1x32xf32> to vector<1x32xf32>
    %200 = vector.broadcast %199 : vector<1x32xf32> to vector<16x32xf32>
    %201 = arith.addf %197, %200 : vector<16x32xf32>
    %202 = arith.addf %201, %155 : vector<16x32xf32>
    %c0_80 = arith.constant 0 : index
    %c0_81 = arith.constant 0 : index
    %203 = vector.load %arg19[%c0_80, %c0_81] : memref<16x32xf32, #tpu.memory_space<vmem>>, vector<16x32xf32>
    tpu.vector_store %arg19[%c0_80, %c0_81], %202 {strides = array<i32>} : memref<16x32xf32, #tpu.memory_space<vmem>>, vector<16x32xf32>,
    %c1_i32 = arith.constant 1 : i32
    %204 = arith.cmpi eq, %arg1, %c1_i32 : i32
    %205 = arith.extui %204 : i1 to i32
    %c0_i32_82 = arith.constant 0 : i32
    %206 = arith.cmpi ne, %205, %c0_i32_82 : i32
    scf.if %206 {
      %c0_83 = arith.constant 0 : index
      %c0_84 = arith.constant 0 : index
      %207 = vector.load %arg19[%c0_83, %c0_84] : memref<16x32xf32, #tpu.memory_space<vmem>>, vector<16x32xf32>
      %c0_85 = arith.constant 0 : index
      %c0_86 = arith.constant 0 : index
      %208 = vector.load %arg16[%c0_85, %c0_86] : memref<1x32xf32, #tpu.memory_space<vmem>>, vector<1x32xf32>
      %c0_87 = arith.constant 0 : index
      %c0_88 = arith.constant 0 : index
      %209 = vector.load %arg17[%c0_87, %c0_88] : memref<1x32xf32, #tpu.memory_space<vmem>>, vector<1x32xf32>
      %cst_89 = arith.constant dense<0.000000e+00> : vector<16xf32>
      %210 = vector.multi_reduction <add>, %207, %cst_89 [1] : vector<16x32xf32> to vector<16xf32>
      %211 = vector.shape_cast %210 : vector<16xf32> to vector<16x1xf32>
      %cst_90 = arith.constant 3.200000e+01 : f32
      %212 = vector.broadcast %cst_90 : f32 to vector<16x1xf32>
      %213 = arith.divf %211, %212 : vector<16x1xf32>
      %214 = arith.mulf %207, %207 : vector<16x32xf32>
      %cst_91 = arith.constant dense<0.000000e+00> : vector<16xf32>
      %215 = vector.multi_reduction <add>, %214, %cst_91 [1] : vector<16x32xf32> to vector<16xf32>
      %216 = vector.shape_cast %215 : vector<16xf32> to vector<16x1xf32>
      %cst_92 = arith.constant 3.200000e+01 : f32
      %217 = vector.broadcast %cst_92 : f32 to vector<16x1xf32>
      %218 = arith.divf %216, %217 : vector<16x1xf32>
      %219 = arith.mulf %213, %213 : vector<16x1xf32>
      %220 = arith.subf %218, %219 : vector<16x1xf32>
      %cst_93 = arith.constant 0.000000e+00 : f32
      %221 = vector.broadcast %cst_93 : f32 to vector<16x1xf32>
      %222 = arith.maximumf %220, %221 : vector<16x1xf32>
      %223 = vector.broadcast %213 : vector<16x1xf32> to vector<16x32xf32>
      %224 = arith.subf %207, %223 : vector<16x32xf32>
      %cst_94 = arith.constant 9.99999997E-7 : f32
      %225 = vector.broadcast %cst_94 : f32 to vector<16x1xf32>
      %226 = arith.addf %222, %225 : vector<16x1xf32>
      %227 = math.rsqrt %226 : vector<16x1xf32>
      %228 = vector.broadcast %227 : vector<16x1xf32> to vector<16x32xf32>
      %229 = arith.mulf %224, %228 : vector<16x32xf32>
      %230 = vector.broadcast %208 : vector<1x32xf32> to vector<16x32xf32>
      %231 = arith.mulf %229, %230 : vector<16x32xf32>
      %232 = vector.broadcast %209 : vector<1x32xf32> to vector<16x32xf32>
      %233 = arith.addf %231, %232 : vector<16x32xf32>
      %234 = vector.shape_cast %233 : vector<16x32xf32> to vector<2x8x32xf32>
      %235 = arith.truncf %234 : vector<2x8x32xf32> to vector<2x8x32xbf16>
      %c0_95 = arith.constant 0 : index
      %c0_96 = arith.constant 0 : index
      %c0_97 = arith.constant 0 : index
      %236 = vector.load %arg18[%c0_95, %c0_96, %c0_97] : memref<2x8x32xbf16, #tpu.memory_space<vmem>>, vector<2x8x32xbf16>
      tpu.vector_store %arg18[%c0_95, %c0_96, %c0_97], %235 {strides = array<i32>} : memref<2x8x32xbf16, #tpu.memory_space<vmem>>, vector<2x8x32xbf16>,
    } else {
    }
    return
  }
  func.func @transform_0(%arg0: i32, %arg1: i32) -> (i32, i32, i32) {
    %c0_i32 = arith.constant 0 : i32
    %c0_i32_0 = arith.constant 0 : i32
    %c0_i32_1 = arith.constant 0 : i32
    return %arg0, %c0_i32, %c0_i32_0 : i32, i32, i32
  }
  func.func @transform_1(%arg0: i32, %arg1: i32) -> (i32, i32, i32) {
    %c0_i32 = arith.constant 0 : i32
    %c0_i32_0 = arith.constant 0 : i32
    %c0_i32_1 = arith.constant 0 : i32
    return %arg0, %c0_i32, %c0_i32_0 : i32, i32, i32
  }
  func.func @transform_2(%arg0: i32, %arg1: i32) -> (i32, i32, i32) {
    %c0_i32 = arith.constant 0 : i32
    %c0_i32_0 = arith.constant 0 : i32
    %c0_i32_1 = arith.constant 0 : i32
    return %arg1, %c0_i32, %c0_i32_0 : i32, i32, i32
  }
  func.func @transform_3(%arg0: i32, %arg1: i32) -> (i32, i32, i32) {
    %c0_i32 = arith.constant 0 : i32
    %c0_i32_0 = arith.constant 0 : i32
    %c0_i32_1 = arith.constant 0 : i32
    return %arg1, %c0_i32, %c0_i32_0 : i32, i32, i32
  }
  func.func @transform_4(%arg0: i32, %arg1: i32) -> (i32, i32, i32) {
    %c0_i32 = arith.constant 0 : i32
    %c0_i32_0 = arith.constant 0 : i32
    %c0_i32_1 = arith.constant 0 : i32
    return %arg1, %c0_i32, %c0_i32_0 : i32, i32, i32
  }
  func.func @transform_5(%arg0: i32, %arg1: i32) -> (i32, i32, i32) {
    %c0_i32 = arith.constant 0 : i32
    %c0_i32_0 = arith.constant 0 : i32
    %c0_i32_1 = arith.constant 0 : i32
    return %arg1, %c0_i32, %c0_i32_0 : i32, i32, i32
  }
  func.func @transform_6(%arg0: i32, %arg1: i32) -> (i32, i32, i32) {
    %c0_i32 = arith.constant 0 : i32
    %c0_i32_0 = arith.constant 0 : i32
    %c0_i32_1 = arith.constant 0 : i32
    return %arg1, %c0_i32, %c0_i32_0 : i32, i32, i32
  }
  func.func @transform_7(%arg0: i32, %arg1: i32) -> (i32, i32, i32) {
    %c0_i32 = arith.constant 0 : i32
    %c0_i32_0 = arith.constant 0 : i32
    %c0_i32_1 = arith.constant 0 : i32
    return %arg1, %c0_i32, %c0_i32_0 : i32, i32, i32
  }
  func.func @transform_8(%arg0: i32, %arg1: i32) -> (i32, i32, i32) {
    %c0_i32 = arith.constant 0 : i32
    %c0_i32_0 = arith.constant 0 : i32
    %c0_i32_1 = arith.constant 0 : i32
    return %arg1, %c0_i32, %c0_i32_0 : i32, i32, i32
  }
  func.func @transform_9(%arg0: i32, %arg1: i32) -> (i32, i32, i32) {
    %c0_i32 = arith.constant 0 : i32
    %c0_i32_0 = arith.constant 0 : i32
    %c0_i32_1 = arith.constant 0 : i32
    return %arg1, %c0_i32, %c0_i32_0 : i32, i32, i32
  }
  func.func @transform_10(%arg0: i32, %arg1: i32) -> (i32, i32, i32) {
    %c0_i32 = arith.constant 0 : i32
    %c0_i32_0 = arith.constant 0 : i32
    %c0_i32_1 = arith.constant 0 : i32
    return %arg1, %c0_i32, %c0_i32_0 : i32, i32, i32
  }
  func.func @transform_11(%arg0: i32, %arg1: i32) -> (i32, i32, i32) {
    %c0_i32 = arith.constant 0 : i32
    %c0_i32_0 = arith.constant 0 : i32
    %c0_i32_1 = arith.constant 0 : i32
    return %arg1, %c0_i32, %c0_i32_0 : i32, i32, i32
  }
  func.func @transform_12(%arg0: i32, %arg1: i32) -> (i32, i32, i32) {
    %c0_i32 = arith.constant 0 : i32
    %c0_i32_0 = arith.constant 0 : i32
    %c0_i32_1 = arith.constant 0 : i32
    return %arg1, %c0_i32, %c0_i32_0 : i32, i32, i32
  }
  func.func @transform_13(%arg0: i32, %arg1: i32) -> (i32, i32, i32) {
    %c0_i32 = arith.constant 0 : i32
    %c0_i32_0 = arith.constant 0 : i32
    %c0_i32_1 = arith.constant 0 : i32
    return %arg1, %c0_i32, %c0_i32_0 : i32, i32, i32
  }
  func.func @transform_14(%arg0: i32, %arg1: i32) -> (i32, i32) {
    %c0_i32 = arith.constant 0 : i32
    %c0_i32_0 = arith.constant 0 : i32
    %c0_i32_1 = arith.constant 0 : i32
    return %c0_i32, %c0_i32_0 : i32, i32
  }
  func.func @transform_15(%arg0: i32, %arg1: i32) -> (i32, i32) {
    %c0_i32 = arith.constant 0 : i32
    %c0_i32_0 = arith.constant 0 : i32
    %c0_i32_1 = arith.constant 0 : i32
    return %c0_i32, %c0_i32_0 : i32, i32
  }
  func.func @transform_16(%arg0: i32, %arg1: i32) -> (i32, i32, i32) {
    %c0_i32 = arith.constant 0 : i32
    %c0_i32_0 = arith.constant 0 : i32
    %c0_i32_1 = arith.constant 0 : i32
    return %arg0, %c0_i32, %c0_i32_0 : i32, i32, i32
  }
}

</mosaic_0001>

<llo_original>
// kernel: tpu_custom_call.1
$region0: #{tpu_custom_call.1}
  #allocation0 [shape = 'u32[]', space=smem, size = 0x4, offset = 0x4, fixed_abs, tag = 'smem constant byte address 0x4 - core index']
  #allocation1 [shape = 'u32[144,128]{1,0:T(1,128)}', space=vmem, size = 0x12000, scoped, tag = 'internal scratch']
  #allocation2 [shape = 'f32[16,32]{1,0:T(8,128)}', space=vmem, size = 0x2000, scoped, tag = 'scratch operand']
  #allocation3 [shape = 'f32[16,32]{1,0:T(8,128)}', space=vmem, size = 0x2000, scoped, tag = 'scratch operand']
  %s0 = inlined_call_operand.hbm [shape: bf16[2,8,32], index: 0, kind: input, shape index: {}]
  %s1 = inlined_call_operand.vmem [shape: f32[2,1,8], index: 1, kind: input, shape index: {}]
  %s2 = inlined_call_operand.vmem [shape: f32[2,1,32], index: 2, kind: input, shape index: {}]
  %s3 = inlined_call_operand.vmem [shape: f32[2,1,32], index: 3, kind: input, shape index: {}]
  %s4 = inlined_call_operand.vmem [shape: bf16[2,32,96], index: 4, kind: input, shape index: {}]
  %s5 = inlined_call_operand.vmem [shape: f32[2,1,96], index: 5, kind: input, shape index: {}]
  %s6 = inlined_call_operand.vmem [shape: bf16[2,32,32], index: 6, kind: input, shape index: {}]
  %s7 = inlined_call_operand.vmem [shape: f32[2,1,32], index: 7, kind: input, shape index: {}]
  %s8 = inlined_call_operand.vmem [shape: f32[2,1,32], index: 8, kind: input, shape index: {}]
  %s9 = inlined_call_operand.hbm [shape: f32[2,1,32], index: 9, kind: input, shape index: {}]
  %s10 = inlined_call_operand.vmem [shape: bf16[2,32,64], index: 10, kind: input, shape index: {}]
  %s11 = inlined_call_operand.hbm [shape: f32[2,1,64], index: 11, kind: input, shape index: {}]
  %s12 = inlined_call_operand.vmem [shape: bf16[2,64,32], index: 12, kind: input, shape index: {}]
  %s13 = inlined_call_operand.vmem [shape: f32[2,1,32], index: 13, kind: input, shape index: {}]
  %s14 = inlined_call_operand.vmem [shape: f32[1,32], index: 14, kind: input, shape index: {}]
  %s15 = inlined_call_operand.vmem [shape: f32[1,32], index: 15, kind: input, shape index: {}]
  %s16 = inlined_call_operand.hbm [shape: bf16[2,8,32], index: 16, kind: output, shape index: {}]
  %s17 = sld [smem:[#allocation0]]
  $region117: #{tpu_custom_call.1} parent=0
    _
  %s19 = ssub.s32 1, %s17
  %s20 = scalar_select 0, %s19, %s17
  $region1: #{tpu_custom_call.1} parent=0
    #allocation4 [shape = 'u8[4096]{0}', space=vmem, size = 0x1000, scoped, tag = 'input window, operand 0, single buffered']
    #allocation5 [shape = 's32[2]{0}', space=sflag, size = 0x8, scoped, tag = 'scoped memory for tpu_custom_call.1']
    #allocation6 [shape = 's32[2]{0}', space=sflag, size = 0x8, scoped, tag = 'scoped memory for tpu_custom_call.1']
    #allocation7 [shape = 'u8[1024]{0}', space=vmem, size = 0x400, scoped, tag = 'input window, operand 9']
    #allocation8 [shape = 's32[2]{0}', space=sflag, size = 0x8, scoped, tag = 'scoped memory for tpu_custom_call.1']
    #allocation9 [shape = 'u8[1024]{0}', space=vmem, size = 0x400, scoped, tag = 'input window, operand 11']
    #allocation10 [shape = 'u8[4096]{0}', space=vmem, size = 0x1000, scoped, tag = 'output window, operand 0, single buffered']
    %21 = vsyncpa [#allocation5], 0
    %22 = vsyncpa [#allocation8], 0
    %s23 = scalar_lea.sflag [#allocation8], 1
    %24 = vsyncpa %s23, 0
    %25 = vsyncpa [#allocation6], 0
    loop: start=0, step=1, limit=4
    $region2: #{tpu_custom_call.1} parent=1 // loop_pre_header
      _
    $region3: #{tpu_custom_call.1} parent=1 // loop_header
      %s27 = sphi 0, %s31
      %p28 = scmp.ge.s32.totalorder %s27, 4
      %s34 = sphi 0, %s46
      %s35 = sphi 0, %s42
      %s36 = sphi 0, %s34
      %s37 = sphi 0, %s35
      %s38 = sphi 0, %s36
      %s39 = sphi 0, %s37
      %s49 = sphi 0, %s51
      %s52 = sphi 0, %s49
      %s53 = sphi 0, %s52
      %s69 = sphi 0, %s53
      %s75 = sphi 0, %s77
      %s78 = sphi 0, %s75
      %s79 = sphi 0, %s78
      %s95 = sphi 0, %s79
      %s101 = sphi 0, %s103
      %s104 = sphi 0, %s101
      %s105 = sphi 0, %s104
      %s121 = sphi 0, %s105
      %s127 = sphi 0, %s129
      %s130 = sphi 0, %s127
      %s131 = sphi 0, %s130
      %s147 = sphi 0, %s131
      %s153 = sphi 0, %s155
      %s156 = sphi 0, %s153
      %s157 = sphi 0, %s156
      %s173 = sphi 0, %s157
      %s179 = sphi 0, %s181
      %s182 = sphi 0, %s179
      %s183 = sphi 0, %s182
      %s199 = sphi 0, %s183
      %s205 = sphi 0, %s207
      %s208 = sphi 0, %s205
      %s209 = sphi 0, %s208
      %s225 = sphi 0, %s209
      %s231 = sphi 0, %s233
      %s234 = sphi 0, %s231
      %s235 = sphi 0, %s234
      %s251 = sphi 0, %s235
      %s257 = sphi 0, %s259
      %s260 = sphi 0, %s257
      %s261 = sphi 0, %s260
      %s277 = sphi 0, %s261
      %s283 = sphi 0, %s285
      %s286 = sphi 0, %s283
      %s287 = sphi 0, %s286
      %s303 = sphi 0, %s287
      %s309 = sphi 0, %s311
      %s312 = sphi 0, %s309
      %s313 = sphi 0, %s312
      %s329 = sphi 0, %s313
      %s335 = sphi 0, %s337
      %s338 = sphi 0, %s335
      %s339 = sphi 0, %s338
      %s355 = sphi 0, %s339
      %s361 = sphi 0, %s363
      %s364 = sphi 0, %s361
      %s365 = sphi 0, %s364
      %s381 = sphi 0, %s365
      %s387 = sphi 0, %s389
      %s390 = sphi 0, %s387
      %s391 = sphi 0, %s390
      %s407 = sphi 0, %s391
      %s411 = sphi 0, %s411
      %s413 = sphi 0, %s411
      %s414 = sphi 0, %s413
      %s428 = sphi 0, %s414
      %s432 = sphi 0, %s432
      %s434 = sphi 0, %s432
      %s435 = sphi 0, %s434
      %s449 = sphi 0, %s435
      %s455 = sphi 0, %s457
      %s458 = sphi 0, %s455
      %s459 = sphi 0, %s458
      %s475 = sphi 0, %s459
    $region4: #{tpu_custom_call.1} parent=1 // loop_header_branch
      %30 = sbr.rel (%p28) target = $region8
    $region5: #{tpu_custom_call.1} parent=1 // loop_body
      %s32 = ssub.s32 %s27, 1
      %s33 = ssub.s32 %s27, 2
      %s40 = sadd.s32 1, %s35
      %p41 = scmp.ge.s32.totalorder %s40, 2
      %s42 = scalar_select %p41, 0, %s40
      %s43 = sadd.s32 1, %s34
      %s44 = scalar_select %p41, %s43, %s34
      %p45 = scmp.ge.s32.totalorder %s44, 1
      %s46 = scalar_select %p45, 0, %s44
      %s47 = ssub.s32 %s34, %s46
      %p48 = scmp.eq.s32.totalorder %s47, 0
      %s50 = sadd.s32 %s49, 1
      %s51 = scalar_select %p48, %s49, %s50
      %p54 = pneg %p48
      %p55 = scmp.eq.s32.totalorder %s27, 1
      %p56 = por %p54, %p55
      %p57 = scmp.ne.s32.totalorder %s49, %s52
      %p58 = scmp.eq.s32.totalorder %s27, 0
      %p59 = por %p57, %p58
      %p60 = scmp.ne.s32.totalorder %s49, %s52
      %p61 = scmp.eq.s32.totalorder %s32, 1
      %p62 = por %p60, %p61
      %p63 = scmp.ne.s32.totalorder %s52, %s53
      %p64 = scmp.eq.s32.totalorder %s32, 0
      %p65 = por %p63, %p64
      %p66 = scmp.ne.s32.totalorder %s52, %s53
      %p67 = scmp.eq.s32.totalorder %s33, 1
      %p68 = por %p66, %p67
      %p70 = scmp.ne.s32.totalorder %s53, %s69
      %p71 = scmp.eq.s32.totalorder %s33, 0
      %p72 = por %p70, %p71
      %s73 = ssub.s32 %s34, %s46
      %p74 = scmp.eq.s32.totalorder %s73, 0
      %s76 = sadd.s32 %s75, 1
      %s77 = scalar_select %p74, %s75, %s76
      %p80 = pneg %p74
      %p81 = scmp.eq.s32.totalorder %s27, 1
      %p82 = por %p80, %p81
      %p83 = scmp.ne.s32.totalorder %s75, %s78
      %p84 = scmp.eq.s32.totalorder %s27, 0
      %p85 = por %p83, %p84
      %p86 = scmp.ne.s32.totalorder %s75, %s78
      %p87 = scmp.eq.s32.totalorder %s32, 1
      %p88 = por %p86, %p87
      %p89 = scmp.ne.s32.totalorder %s78, %s79
      %p90 = scmp.eq.s32.totalorder %s32, 0
      %p91 = por %p89, %p90
      %p92 = scmp.ne.s32.totalorder %s78, %s79
      %p93 = scmp.eq.s32.totalorder %s33, 1
      %p94 = por %p92, %p93
      %p96 = scmp.ne.s32.totalorder %s79, %s95
      %p97 = scmp.eq.s32.totalorder %s33, 0
      %p98 = por %p96, %p97
      %s99 = ssub.s32 %s35, %s42
      %p100 = scmp.eq.s32.totalorder %s99, 0
      %s102 = sadd.s32 %s101, 1
      %s103 = scalar_select %p100, %s101, %s102
      %p106 = pneg %p100
      %p107 = scmp.eq.s32.totalorder %s27, 1
      %p108 = por %p106, %p107
      %p109 = scmp.ne.s32.totalorder %s101, %s104
      %p110 = scmp.eq.s32.totalorder %s27, 0
      %p111 = por %p109, %p110
      %p112 = scmp.ne.s32.totalorder %s101, %s104
      %p113 = scmp.eq.s32.totalorder %s32, 1
      %p114 = por %p112, %p113
      %p115 = scmp.ne.s32.totalorder %s104, %s105
      %p116 = scmp.eq.s32.totalorder %s32, 0
      %p117 = por %p115, %p116
      %p118 = scmp.ne.s32.totalorder %s104, %s105
      %p119 = scmp.eq.s32.totalorder %s33, 1
      %p120 = por %p118, %p119
      %p122 = scmp.ne.s32.totalorder %s105, %s121
      %p123 = scmp.eq.s32.totalorder %s33, 0
      %p124 = por %p122, %p123
      %s125 = ssub.s32 %s35, %s42
      %p126 = scmp.eq.s32.totalorder %s125, 0
      %s128 = sadd.s32 %s127, 1
      %s129 = scalar_select %p126, %s127, %s128
      %p132 = pneg %p126
      %p133 = scmp.eq.s32.totalorder %s27, 1
      %p134 = por %p132, %p133
      %p135 = scmp.ne.s32.totalorder %s127, %s130
      %p136 = scmp.eq.s32.totalorder %s27, 0
      %p137 = por %p135, %p136
      %p138 = scmp.ne.s32.totalorder %s127, %s130
      %p139 = scmp.eq.s32.totalorder %s32, 1
      %p140 = por %p138, %p139
      %p141 = scmp.ne.s32.totalorder %s130, %s131
      %p142 = scmp.eq.s32.totalorder %s32, 0
      %p143 = por %p141, %p142
      %p144 = scmp.ne.s32.totalorder %s130, %s131
      %p145 = scmp.eq.s32.totalorder %s33, 1
      %p146 = por %p144, %p145
      %p148 = scmp.ne.s32.totalorder %s131, %s147
      %p149 = scmp.eq.s32.totalorder %s33, 0
      %p150 = por %p148, %p149
      %s151 = ssub.s32 %s35, %s42
      %p152 = scmp.eq.s32.totalorder %s151, 0
      %s154 = sadd.s32 %s153, 1
      %s155 = scalar_select %p152, %s153, %s154
      %p158 = pneg %p152
      %p159 = scmp.eq.s32.totalorder %s27, 1
      %p160 = por %p158, %p159
      %p161 = scmp.ne.s32.totalorder %s153, %s156
      %p162 = scmp.eq.s32.totalorder %s27, 0
      %p163 = por %p161, %p162
      %p164 = scmp.ne.s32.totalorder %s153, %s156
      %p165 = scmp.eq.s32.totalorder %s32, 1
      %p166 = por %p164, %p165
      %p167 = scmp.ne.s32.totalorder %s156, %s157
      %p168 = scmp.eq.s32.totalorder %s32, 0
      %p169 = por %p167, %p168
      %p170 = scmp.ne.s32.totalorder %s156, %s157
      %p171 = scmp.eq.s32.totalorder %s33, 1
      %p172 = por %p170, %p171
      %p174 = scmp.ne.s32.totalorder %s157, %s173
      %p175 = scmp.eq.s32.totalorder %s33, 0
      %p176 = por %p174, %p175
      %s177 = ssub.s32 %s35, %s42
      %p178 = scmp.eq.s32.totalorder %s177, 0
      %s180 = sadd.s32 %s179, 1
      %s181 = scalar_select %p178, %s179, %s180
      %p184 = pneg %p178
      %p185 = scmp.eq.s32.totalorder %s27, 1
      %p186 = por %p184, %p185
      %p187 = scmp.ne.s32.totalorder %s179, %s182
      %p188 = scmp.eq.s32.totalorder %s27, 0
      %p189 = por %p187, %p188
      %p190 = scmp.ne.s32.totalorder %s179, %s182
      %p191 = scmp.eq.s32.totalorder %s32, 1
      %p192 = por %p190, %p191
      %p193 = scmp.ne.s32.totalorder %s182, %s183
      %p194 = scmp.eq.s32.totalorder %s32, 0
      %p195 = por %p193, %p194
      %p196 = scmp.ne.s32.totalorder %s182, %s183
      %p197 = scmp.eq.s32.totalorder %s33, 1
      %p198 = por %p196, %p197
      %p200 = scmp.ne.s32.totalorder %s183, %s199
      %p201 = scmp.eq.s32.totalorder %s33, 0
      %p202 = por %p200, %p201
      %s203 = ssub.s32 %s35, %s42
      %p204 = scmp.eq.s32.totalorder %s203, 0
      %s206 = sadd.s32 %s205, 1
      %s207 = scalar_select %p204, %s205, %s206
      %p210 = pneg %p204
      %p211 = scmp.eq.s32.totalorder %s27, 1
      %p212 = por %p210, %p211
      %p213 = scmp.ne.s32.totalorder %s205, %s208
      %p214 = scmp.eq.s32.totalorder %s27, 0
      %p215 = por %p213, %p214
      %p216 = scmp.ne.s32.totalorder %s205, %s208
      %p217 = scmp.eq.s32.totalorder %s32, 1
      %p218 = por %p216, %p217
      %p219 = scmp.ne.s32.totalorder %s208, %s209
      %p220 = scmp.eq.s32.totalorder %s32, 0
      %p221 = por %p219, %p220
      %p222 = scmp.ne.s32.totalorder %s208, %s209
      %p223 = scmp.eq.s32.totalorder %s33, 1
      %p224 = por %p222, %p223
      %p226 = scmp.ne.s32.totalorder %s209, %s225
      %p227 = scmp.eq.s32.totalorder %s33, 0
      %p228 = por %p226, %p227
      %s229 = ssub.s32 %s35, %s42
      %p230 = scmp.eq.s32.totalorder %s229, 0
      %s232 = sadd.s32 %s231, 1
      %s233 = scalar_select %p230, %s231, %s232
      %p236 = pneg %p230
      %p237 = scmp.eq.s32.totalorder %s27, 1
      %p238 = por %p236, %p237
      %p239 = scmp.ne.s32.totalorder %s231, %s234
      %p240 = scmp.eq.s32.totalorder %s27, 0
      %p241 = por %p239, %p240
      %p242 = scmp.ne.s32.totalorder %s231, %s234
      %p243 = scmp.eq.s32.totalorder %s32, 1
      %p244 = por %p242, %p243
      %p245 = scmp.ne.s32.totalorder %s234, %s235
      %p246 = scmp.eq.s32.totalorder %s32, 0
      %p247 = por %p245, %p246
      %p248 = scmp.ne.s32.totalorder %s234, %s235
      %p249 = scmp.eq.s32.totalorder %s33, 1
      %p250 = por %p248, %p249
      %p252 = scmp.ne.s32.totalorder %s235, %s251
      %p253 = scmp.eq.s32.totalorder %s33, 0
      %p254 = por %p252, %p253
      %s255 = ssub.s32 %s35, %s42
      %p256 = scmp.eq.s32.totalorder %s255, 0
      %s258 = sadd.s32 %s257, 1
      %s259 = scalar_select %p256, %s257, %s258
      %p262 = pneg %p256
      %p263 = scmp.eq.s32.totalorder %s27, 1
      %p264 = por %p262, %p263
      %p265 = scmp.ne.s32.totalorder %s257, %s260
      %p266 = scmp.eq.s32.totalorder %s27, 0
      %p267 = por %p265, %p266
      %p268 = scmp.ne.s32.totalorder %s257, %s260
      %p269 = scmp.eq.s32.totalorder %s32, 1
      %p270 = por %p268, %p269
      %p271 = scmp.ne.s32.totalorder %s260, %s261
      %p272 = scmp.eq.s32.totalorder %s32, 0
      %p273 = por %p271, %p272
      %p274 = scmp.ne.s32.totalorder %s260, %s261
      %p275 = scmp.eq.s32.totalorder %s33, 1
      %p276 = por %p274, %p275
      %p278 = scmp.ne.s32.totalorder %s261, %s277
      %p279 = scmp.eq.s32.totalorder %s33, 0
      %p280 = por %p278, %p279
      %s281 = ssub.s32 %s35, %s42
      %p282 = scmp.eq.s32.totalorder %s281, 0
      %s284 = sadd.s32 %s283, 1
      %s285 = scalar_select %p282, %s283, %s284
      %p288 = pneg %p282
      %p289 = scmp.eq.s32.totalorder %s27, 1
      %p290 = por %p288, %p289
      %p291 = scmp.ne.s32.totalorder %s283, %s286
      %p292 = scmp.eq.s32.totalorder %s27, 0
      %p293 = por %p291, %p292
      %p294 = scmp.ne.s32.totalorder %s283, %s286
      %p295 = scmp.eq.s32.totalorder %s32, 1
      %p296 = por %p294, %p295
      %p297 = scmp.ne.s32.totalorder %s286, %s287
      %p298 = scmp.eq.s32.totalorder %s32, 0
      %p299 = por %p297, %p298
      %p300 = scmp.ne.s32.totalorder %s286, %s287
      %p301 = scmp.eq.s32.totalorder %s33, 1
      %p302 = por %p300, %p301
      %p304 = scmp.ne.s32.totalorder %s287, %s303
      %p305 = scmp.eq.s32.totalorder %s33, 0
      %p306 = por %p304, %p305
      %s307 = ssub.s32 %s35, %s42
      %p308 = scmp.eq.s32.totalorder %s307, 0
      %s310 = sadd.s32 %s309, 1
      %s311 = scalar_select %p308, %s309, %s310
      %p314 = pneg %p308
      %p315 = scmp.eq.s32.totalorder %s27, 1
      %p316 = por %p314, %p315
      %p317 = scmp.ne.s32.totalorder %s309, %s312
      %p318 = scmp.eq.s32.totalorder %s27, 0
      %p319 = por %p317, %p318
      %p320 = scmp.ne.s32.totalorder %s309, %s312
      %p321 = scmp.eq.s32.totalorder %s32, 1
      %p322 = por %p320, %p321
      %p323 = scmp.ne.s32.totalorder %s312, %s313
      %p324 = scmp.eq.s32.totalorder %s32, 0
      %p325 = por %p323, %p324
      %p326 = scmp.ne.s32.totalorder %s312, %s313
      %p327 = scmp.eq.s32.totalorder %s33, 1
      %p328 = por %p326, %p327
      %p330 = scmp.ne.s32.totalorder %s313, %s329
      %p331 = scmp.eq.s32.totalorder %s33, 0
      %p332 = por %p330, %p331
      %s333 = ssub.s32 %s35, %s42
      %p334 = scmp.eq.s32.totalorder %s333, 0
      %s336 = sadd.s32 %s335, 1
      %s337 = scalar_select %p334, %s335, %s336
      %p340 = pneg %p334
      %p341 = scmp.eq.s32.totalorder %s27, 1
      %p342 = por %p340, %p341
      %p343 = scmp.ne.s32.totalorder %s335, %s338
      %p344 = scmp.eq.s32.totalorder %s27, 0
      %p345 = por %p343, %p344
      %p346 = scmp.ne.s32.totalorder %s335, %s338
      %p347 = scmp.eq.s32.totalorder %s32, 1
      %p348 = por %p346, %p347
      %p349 = scmp.ne.s32.totalorder %s338, %s339
      %p350 = scmp.eq.s32.totalorder %s32, 0
      %p351 = por %p349, %p350
      %p352 = scmp.ne.s32.totalorder %s338, %s339
      %p353 = scmp.eq.s32.totalorder %s33, 1
      %p354 = por %p352, %p353
      %p356 = scmp.ne.s32.totalorder %s339, %s355
      %p357 = scmp.eq.s32.totalorder %s33, 0
      %p358 = por %p356, %p357
      %s359 = ssub.s32 %s35, %s42
      %p360 = scmp.eq.s32.totalorder %s359, 0
      %s362 = sadd.s32 %s361, 1
      %s363 = scalar_select %p360, %s361, %s362
      %p366 = pneg %p360
      %p367 = scmp.eq.s32.totalorder %s27, 1
      %p368 = por %p366, %p367
      %p369 = scmp.ne.s32.totalorder %s361, %s364
      %p370 = scmp.eq.s32.totalorder %s27, 0
      %p371 = por %p369, %p370
      %p372 = scmp.ne.s32.totalorder %s361, %s364
      %p373 = scmp.eq.s32.totalorder %s32, 1
      %p374 = por %p372, %p373
      %p375 = scmp.ne.s32.totalorder %s364, %s365
      %p376 = scmp.eq.s32.totalorder %s32, 0
      %p377 = por %p375, %p376
      %p378 = scmp.ne.s32.totalorder %s364, %s365
      %p379 = scmp.eq.s32.totalorder %s33, 1
      %p380 = por %p378, %p379
      %p382 = scmp.ne.s32.totalorder %s365, %s381
      %p383 = scmp.eq.s32.totalorder %s33, 0
      %p384 = por %p382, %p383
      %s385 = ssub.s32 %s35, %s42
      %p386 = scmp.eq.s32.totalorder %s385, 0
      %s388 = sadd.s32 %s387, 1
      %s389 = scalar_select %p386, %s387, %s388
      %p392 = pneg %p386
      %p393 = scmp.eq.s32.totalorder %s27, 1
      %p394 = por %p392, %p393
      %p395 = scmp.ne.s32.totalorder %s387, %s390
      %p396 = scmp.eq.s32.totalorder %s27, 0
      %p397 = por %p395, %p396
      %p398 = scmp.ne.s32.totalorder %s387, %s390
      %p399 = scmp.eq.s32.totalorder %s32, 1
      %p400 = por %p398, %p399
      %p401 = scmp.ne.s32.totalorder %s390, %s391
      %p402 = scmp.eq.s32.totalorder %s32, 0
      %p403 = por %p401, %p402
      %p404 = scmp.ne.s32.totalorder %s390, %s391
      %p405 = scmp.eq.s32.totalorder %s33, 1
      %p406 = por %p404, %p405
      %p408 = scmp.ne.s32.totalorder %s391, %s407
      %p409 = scmp.eq.s32.totalorder %s33, 0
      %p410 = por %p408, %p409
      %s412 = sadd.s32 %s411, 1
      %p415 = scmp.eq.s32.totalorder %s27, 1
      %p416 = scmp.ne.s32.totalorder %s411, %s413
      %p417 = scmp.eq.s32.totalorder %s27, 0
      %p418 = por %p416, %p417
      %p419 = scmp.ne.s32.totalorder %s411, %s413
      %p420 = scmp.eq.s32.totalorder %s32, 1
      %p421 = por %p419, %p420
      %p422 = scmp.ne.s32.totalorder %s413, %s414
      %p423 = scmp.eq.s32.totalorder %s32, 0
      %p424 = por %p422, %p423
      %p425 = scmp.ne.s32.totalorder %s413, %s414
      %p426 = scmp.eq.s32.totalorder %s33, 1
      %p427 = por %p425, %p426
      %p429 = scmp.ne.s32.totalorder %s414, %s428
      %p430 = scmp.eq.s32.totalorder %s33, 0
      %p431 = por %p429, %p430
      %s433 = sadd.s32 %s432, 1
      %p436 = scmp.eq.s32.totalorder %s27, 1
      %p437 = scmp.ne.s32.totalorder %s432, %s434
      %p438 = scmp.eq.s32.totalorder %s27, 0
      %p439 = por %p437, %p438
      %p440 = scmp.ne.s32.totalorder %s432, %s434
      %p441 = scmp.eq.s32.totalorder %s32, 1
      %p442 = por %p440, %p441
      %p443 = scmp.ne.s32.totalorder %s434, %s435
      %p444 = scmp.eq.s32.totalorder %s32, 0
      %p445 = por %p443, %p444
      %p446 = scmp.ne.s32.totalorder %s434, %s435
      %p447 = scmp.eq.s32.totalorder %s33, 1
      %p448 = por %p446, %p447
      %p450 = scmp.ne.s32.totalorder %s435, %s449
      %p451 = scmp.eq.s32.totalorder %s33, 0
      %p452 = por %p450, %p451
      %s453 = ssub.s32 %s34, %s46
      %p454 = scmp.eq.s32.totalorder %s453, 0
      %s456 = sadd.s32 %s455, 1
      %s457 = scalar_select %p454, %s455, %s456
      %p460 = pneg %p454
      %p461 = scmp.eq.s32.totalorder %s27, 1
      %p462 = por %p460, %p461
      %p463 = scmp.ne.s32.totalorder %s455, %s458
      %p464 = scmp.eq.s32.totalorder %s27, 0
      %p465 = por %p463, %p464
      %p466 = scmp.ne.s32.totalorder %s455, %s458
      %p467 = scmp.eq.s32.totalorder %s32, 1
      %p468 = por %p466, %p467
      %p469 = scmp.ne.s32.totalorder %s458, %s459
      %p470 = scmp.eq.s32.totalorder %s32, 0
      %p471 = por %p469, %p470
      %p472 = scmp.ne.s32.totalorder %s458, %s459
      %p473 = scmp.eq.s32.totalorder %s33, 1
      %p474 = por %p472, %p473
      %p476 = scmp.ne.s32.totalorder %s459, %s475
      %p477 = scmp.eq.s32.totalorder %s33, 0
      %p478 = por %p476, %p477
      %p479 = scmp.le.s32.totalorder 1, %s27
      %p480 = scmp.lt.s32.totalorder %s27, 3
      %p481 = pnand %p479, %p480
      %p482 = pneg %p481
      // Predicated region
      $region9: #{tpu_custom_call.1} parent=5 // pred_check
        _
      $region10: #{tpu_custom_call.1} parent=5 // pred_check_branch
        %484 = sbr.rel (%p481) target = $region12
      $region11: #{tpu_custom_call.1} parent=5 // pred_region
        %s485 = ssub.s32 %s27, 1
        // Predicated region
        $region13: #{tpu_custom_call.1} parent=11 // pred_check
          %p486 = pneg %p65
        $region14: #{tpu_custom_call.1} parent=11 // pred_check_branch
          %488 = sbr.rel (%p486) target = $region16
        $region15: #{tpu_custom_call.1} parent=11 // pred_region
          %s489 = smul.u32 2, %s36
          %s491 = ssub.s32 128, 128
          %492 = vsyncadd [#allocation5], %s491
          %s493 = smul.addr %s489, 64
          %s494 = scalar_lea.hbm %s0, %s493
          %s495 = sshll.u32 [#allocation4], 4
          %s496 = int_to_ptr.vmem [resolvable:$true] %s495
          %501 = dma.hbm_to_vmem [thread:$0]  %s494, 128, %s496, [#allocation5], 64, 64, 4
        $region16: #{tpu_custom_call.1} parent=11 // pred_fallthru
          _
        // Predicated region
        $region17: #{tpu_custom_call.1} parent=11 // pred_check
          %p502 = pneg %p91
        $region18: #{tpu_custom_call.1} parent=11 // pred_check_branch
          %504 = sbr.rel (%p502) target = $region20
        $region19: #{tpu_custom_call.1} parent=11 // pred_region
          %s505 = smul.u32 2, %s36
          %p506 = scmp.lt.s32.totalorder %s505, 1
          %s507 = scalar_select %p506, %s505, 1
          %s508 = scalar_lea.vmem %s1, %s507
          %s509 = smul.u32 2, %s36
        $region20: #{tpu_custom_call.1} parent=11 // pred_fallthru
          _
        // Predicated region
        $region21: #{tpu_custom_call.1} parent=11 // pred_check
          %p510 = pneg %p424
        $region22: #{tpu_custom_call.1} parent=11 // pred_check_branch
          %512 = sbr.rel (%p510) target = $region24
        $region23: #{tpu_custom_call.1} parent=11 // pred_region
          _
        $region24: #{tpu_custom_call.1} parent=11 // pred_fallthru
          _
        // Predicated region
        $region25: #{tpu_custom_call.1} parent=11 // pred_check
          %p513 = pneg %p445
        $region26: #{tpu_custom_call.1} parent=11 // pred_check_branch
          %515 = sbr.rel (%p513) target = $region28
        $region27: #{tpu_custom_call.1} parent=11 // pred_region
          _
        $region28: #{tpu_custom_call.1} parent=11 // pred_fallthru
          _
      $region12: #{tpu_custom_call.1} parent=5 // pred_fallthru
        _
      %p516 = scmp.lt.s32.totalorder %s27, 2
      // Predicated region
      $region29: #{tpu_custom_call.1} parent=5 // pred_check
        %p517 = pneg %p516
      $region30: #{tpu_custom_call.1} parent=5 // pred_check_branch
        %519 = sbr.rel (%p517) target = $region32
      $region31: #{tpu_custom_call.1} parent=5 // pred_region
        // Predicated region
        $region33: #{tpu_custom_call.1} parent=31 // pred_check
          %p520 = pneg %p111
        $region34: #{tpu_custom_call.1} parent=31 // pred_check_branch
          %522 = sbr.rel (%p520) target = $region36
        $region35: #{tpu_custom_call.1} parent=31 // pred_region
          %p523 = scmp.lt.s32.totalorder %s35, 1
          %s524 = scalar_select %p523, %s35, 1
          %s525 = scalar_lea.vmem %s2, %s524
        $region36: #{tpu_custom_call.1} parent=31 // pred_fallthru
          _
        // Predicated region
        $region37: #{tpu_custom_call.1} parent=31 // pred_check
          %p526 = pneg %p137
        $region38: #{tpu_custom_call.1} parent=31 // pred_check_branch
          %528 = sbr.rel (%p526) target = $region40
        $region39: #{tpu_custom_call.1} parent=31 // pred_region
          %p529 = scmp.lt.s32.totalorder %s35, 1
          %s530 = scalar_select %p529, %s35, 1
          %s531 = scalar_lea.vmem %s3, %s530
        $region40: #{tpu_custom_call.1} parent=31 // pred_fallthru
          _
        // Predicated region
        $region41: #{tpu_custom_call.1} parent=31 // pred_check
          %p532 = pneg %p163
        $region42: #{tpu_custom_call.1} parent=31 // pred_check_branch
          %534 = sbr.rel (%p532) target = $region44
        $region43: #{tpu_custom_call.1} parent=31 // pred_region
          %p535 = scmp.lt.s32.totalorder %s35, 1
          %s536 = scalar_select %p535, %s35, 1
          %s537 = smul.addr %s536, 4
          %s538 = smul.addr %s537, 4
          %s539 = scalar_lea.vmem %s4, %s538
        $region44: #{tpu_custom_call.1} parent=31 // pred_fallthru
          _
        // Predicated region
        $region45: #{tpu_custom_call.1} parent=31 // pred_check
          %p540 = pneg %p189
        $region46: #{tpu_custom_call.1} parent=31 // pred_check_branch
          %542 = sbr.rel (%p540) target = $region48
        $region47: #{tpu_custom_call.1} parent=31 // pred_region
          %p543 = scmp.lt.s32.totalorder %s35, 1
          %s544 = scalar_select %p543, %s35, 1
          %s545 = scalar_lea.vmem %s5, %s544
        $region48: #{tpu_custom_call.1} parent=31 // pred_fallthru
          _
        // Predicated region
        $region49: #{tpu_custom_call.1} parent=31 // pred_check
          %p546 = pneg %p215
        $region50: #{tpu_custom_call.1} parent=31 // pred_check_branch
          %548 = sbr.rel (%p546) target = $region52
        $region51: #{tpu_custom_call.1} parent=31 // pred_region
          %p549 = scmp.lt.s32.totalorder %s35, 1
          %s550 = scalar_select %p549, %s35, 1
          %s551 = smul.addr %s550, 4
          %s552 = smul.addr %s551, 4
          %s553 = scalar_lea.vmem %s6, %s552
        $region52: #{tpu_custom_call.1} parent=31 // pred_fallthru
          _
        // Predicated region
        $region53: #{tpu_custom_call.1} parent=31 // pred_check
          %p554 = pneg %p241
        $region54: #{tpu_custom_call.1} parent=31 // pred_check_branch
          %556 = sbr.rel (%p554) target = $region56
        $region55: #{tpu_custom_call.1} parent=31 // pred_region
          %p557 = scmp.lt.s32.totalorder %s35, 1
          %s558 = scalar_select %p557, %s35, 1
          %s559 = scalar_lea.vmem %s7, %s558
        $region56: #{tpu_custom_call.1} parent=31 // pred_fallthru
          _
        // Predicated region
        $region57: #{tpu_custom_call.1} parent=31 // pred_check
          %p560 = pneg %p267
        $region58: #{tpu_custom_call.1} parent=31 // pred_check_branch
          %562 = sbr.rel (%p560) target = $region60
        $region59: #{tpu_custom_call.1} parent=31 // pred_region
          %p563 = scmp.lt.s32.totalorder %s35, 1
          %s564 = scalar_select %p563, %s35, 1
          %s565 = scalar_lea.vmem %s8, %s564
        $region60: #{tpu_custom_call.1} parent=31 // pred_fallthru
          _
        // Predicated region
        $region61: #{tpu_custom_call.1} parent=31 // pred_check
          %p566 = pneg %p293
        $region62: #{tpu_custom_call.1} parent=31 // pred_check_branch
          %568 = sbr.rel (%p566) target = $region64
        $region63: #{tpu_custom_call.1} parent=31 // pred_region
          %s569 = sand.u32 %s27, 1
          %s570 = scalar_lea.sflag [#allocation8], %s569
          %s571 = sand.u32 %s283, 1
          %s572 = scalar_lea.vmem [#allocation7], %s571
          %s574 = ssub.s32 16, 16
          %575 = vsyncadd %s570, %s574
          %s576 = smul.addr %s35, 16
          %s577 = scalar_lea.hbm %s9, %s576
          %s579 = sshll.u32 %s572, 4
          %s580 = int_to_ptr.vmem [resolvable:$true] %s579
          %582 = dma.hbm_to_vmem [thread:$0]  %s577, 16, %s580, %s570
        $region64: #{tpu_custom_call.1} parent=31 // pred_fallthru
          _
        // Predicated region
        $region65: #{tpu_custom_call.1} parent=31 // pred_check
          %p583 = pneg %p319
        $region66: #{tpu_custom_call.1} parent=31 // pred_check_branch
          %585 = sbr.rel (%p583) target = $region68
        $region67: #{tpu_custom_call.1} parent=31 // pred_region
          %p586 = scmp.lt.s32.totalorder %s35, 1
          %s587 = scalar_select %p586, %s35, 1
          %s588 = smul.addr %s587, 4
          %s589 = smul.addr %s588, 4
          %s590 = scalar_lea.vmem %s10, %s589
        $region68: #{tpu_custom_call.1} parent=31 // pred_fallthru
          _
        // Predicated region
        $region69: #{tpu_custom_call.1} parent=31 // pred_check
          %p591 = pneg %p345
        $region70: #{tpu_custom_call.1} parent=31 // pred_check_branch
          %593 = sbr.rel (%p591) target = $region72
        $region71: #{tpu_custom_call.1} parent=31 // pred_region
          %s594 = sand.u32 %s27, 1
          %s595 = scalar_lea.sflag [#allocation8], %s594
          %s596 = sand.u32 %s335, 1
          %s597 = scalar_lea.vmem [#allocation9], %s596
          %s599 = ssub.s32 16, 16
          %600 = vsyncadd %s595, %s599
          %s601 = smul.addr %s35, 16
          %s602 = scalar_lea.hbm %s11, %s601
          %s604 = sshll.u32 %s597, 4
          %s605 = int_to_ptr.vmem [resolvable:$true] %s604
          %607 = dma.hbm_to_vmem [thread:$0]  %s602, 16, %s605, %s595
        $region72: #{tpu_custom_call.1} parent=31 // pred_fallthru
          _
        // Predicated region
        $region73: #{tpu_custom_call.1} parent=31 // pred_check
          %p608 = pneg %p371
        $region74: #{tpu_custom_call.1} parent=31 // pred_check_branch
          %610 = sbr.rel (%p608) target = $region76
        $region75: #{tpu_custom_call.1} parent=31 // pred_region
          %p611 = scmp.lt.s32.totalorder %s35, 1
          %s612 = scalar_select %p611, %s35, 1
          %s613 = smul.addr %s612, 8
          %s614 = smul.addr %s613, 4
          %s615 = scalar_lea.vmem %s12, %s614
        $region76: #{tpu_custom_call.1} parent=31 // pred_fallthru
          _
        // Predicated region
        $region77: #{tpu_custom_call.1} parent=31 // pred_check
          %p616 = pneg %p397
        $region78: #{tpu_custom_call.1} parent=31 // pred_check_branch
          %618 = sbr.rel (%p616) target = $region80
        $region79: #{tpu_custom_call.1} parent=31 // pred_region
          %p619 = scmp.lt.s32.totalorder %s35, 1
          %s620 = scalar_select %p619, %s35, 1
          %s621 = scalar_lea.vmem %s13, %s620
        $region80: #{tpu_custom_call.1} parent=31 // pred_fallthru
          _
      $region32: #{tpu_custom_call.1} parent=5 // pred_fallthru
        _
      %p622 = scmp.le.s32.totalorder 1, %s27
      %p623 = scmp.lt.s32.totalorder %s27, 3
      %p624 = pnand %p622, %p623
      %p625 = pneg %p624
      // Predicated region
      $region81: #{tpu_custom_call.1} parent=5 // pred_check
        _
      $region82: #{tpu_custom_call.1} parent=5 // pred_check_branch
        %627 = sbr.rel (%p624) target = $region84
      $region83: #{tpu_custom_call.1} parent=5 // pred_region
        %s628 = ssub.s32 %s27, 1
        // Predicated region
        $region85: #{tpu_custom_call.1} parent=83 // pred_check
          %p629 = pneg %p65
        $region86: #{tpu_custom_call.1} parent=83 // pred_check_branch
          %631 = sbr.rel (%p629) target = $region88
        $region87: #{tpu_custom_call.1} parent=83 // pred_region
          %632 = dma.done [#allocation5], 128
        $region88: #{tpu_custom_call.1} parent=83 // pred_fallthru
          _
        %s633 = sand.u32 %s32, 1
        %s634 = scalar_lea.sflag [#allocation8], %s633
        %s635 = sand.u32 %s286, 1
        %s636 = scalar_lea.vmem [#allocation7], %s635
        // Predicated region
        $region89: #{tpu_custom_call.1} parent=83 // pred_check
          %p637 = pneg %p299
        $region90: #{tpu_custom_call.1} parent=83 // pred_check_branch
          %639 = sbr.rel (%p637) target = $region92
        $region91: #{tpu_custom_call.1} parent=83 // pred_region
          %640 = dma.done %s634, 16
        $region92: #{tpu_custom_call.1} parent=83 // pred_fallthru
          _
        %s641 = sand.u32 %s32, 1
        %s642 = scalar_lea.sflag [#allocation8], %s641
        %s643 = sand.u32 %s338, 1
        %s644 = scalar_lea.vmem [#allocation9], %s643
        // Predicated region
        $region93: #{tpu_custom_call.1} parent=83 // pred_check
          %p645 = pneg %p351
        $region94: #{tpu_custom_call.1} parent=83 // pred_check_branch
          %647 = sbr.rel (%p645) target = $region96
        $region95: #{tpu_custom_call.1} parent=83 // pred_region
          %648 = dma.done %s642, 16
        $region96: #{tpu_custom_call.1} parent=83 // pred_fallthru
          _
        %p649 = pneg %p65
        %p650 = pneg %p62
        %s651 = smul.u32 2, %s36
        %p652 = scmp.lt.s32.totalorder %s651, 1
        %s653 = scalar_select %p652, %s651, 1
        %s654 = scalar_lea.vmem %s1, %s653
        %p655 = pneg %p91
        %p656 = pneg %p88
        %p657 = scmp.lt.s32.totalorder %s37, 1
        %s658 = scalar_select %p657, %s37, 1
        %s659 = scalar_lea.vmem %s2, %s658
        %p660 = pneg %p117
        %p661 = pneg %p114
        %p662 = scmp.lt.s32.totalorder %s37, 1
        %s663 = scalar_select %p662, %s37, 1
        %s664 = scalar_lea.vmem %s3, %s663
        %p665 = pneg %p143
        %p666 = pneg %p140
        %p667 = scmp.lt.s32.totalorder %s37, 1
        %s668 = scalar_select %p667, %s37, 1
        %s669 = smul.addr %s668, 4
        %s670 = smul.addr %s669, 4
        %s671 = scalar_lea.vmem %s4, %s670
        %p672 = pneg %p169
        %p673 = pneg %p166
        %p674 = scmp.lt.s32.totalorder %s37, 1
        %s675 = scalar_select %p674, %s37, 1
        %s676 = scalar_lea.vmem %s5, %s675
        %p677 = pneg %p195
        %p678 = pneg %p192
        %p679 = scmp.lt.s32.totalorder %s37, 1
        %s680 = scalar_select %p679, %s37, 1
        %s681 = smul.addr %s680, 4
        %s682 = smul.addr %s681, 4
        %s683 = scalar_lea.vmem %s6, %s682
        %p684 = pneg %p221
        %p685 = pneg %p218
        %p686 = scmp.lt.s32.totalorder %s37, 1
        %s687 = scalar_select %p686, %s37, 1
        %s688 = scalar_lea.vmem %s7, %s687
        %p689 = pneg %p247
        %p690 = pneg %p244
        %p691 = scmp.lt.s32.totalorder %s37, 1
        %s692 = scalar_select %p691, %s37, 1
        %s693 = scalar_lea.vmem %s8, %s692
        %p694 = pneg %p273
        %p695 = pneg %p270
        %s696 = sand.u32 %s32, 1
        %s697 = scalar_lea.sflag [#allocation8], %s696
        %s698 = sand.u32 %s286, 1
        %s699 = scalar_lea.vmem [#allocation7], %s698
        %p700 = pneg %p299
        %p701 = pneg %p296
        %p702 = scmp.lt.s32.totalorder %s37, 1
        %s703 = scalar_select %p702, %s37, 1
        %s704 = smul.addr %s703, 4
        %s705 = smul.addr %s704, 4
        %s706 = scalar_lea.vmem %s10, %s705
        %p707 = pneg %p325
        %p708 = pneg %p322
        %s709 = sand.u32 %s32, 1
        %s710 = scalar_lea.sflag [#allocation8], %s709
        %s711 = sand.u32 %s338, 1
        %s712 = scalar_lea.vmem [#allocation9], %s711
        %p713 = pneg %p351
        %p714 = pneg %p348
        %p715 = scmp.lt.s32.totalorder %s37, 1
        %s716 = scalar_select %p715, %s37, 1
        %s717 = smul.addr %s716, 8
        %s718 = smul.addr %s717, 4
        %s719 = scalar_lea.vmem %s12, %s718
        %p720 = pneg %p377
        %p721 = pneg %p374
        %p722 = scmp.lt.s32.totalorder %s37, 1
        %s723 = scalar_select %p722, %s37, 1
        %s724 = scalar_lea.vmem %s13, %s723
        %p725 = pneg %p403
        %p726 = pneg %p400
        %p727 = pneg %p424
        %p728 = pneg %p421
        %p729 = pneg %p445
        %p730 = pneg %p442
        %p731 = pneg %p471
        %p732 = pneg %p468
        %s733 = smul.u32 2, %s36
        %s734 = smul.u32 2, %s36
        %p735 = scmp.lt.s32.totalorder %s734, 1
        %s736 = scalar_select %p735, %s734, 1
        %s737 = scalar_lea.vmem %s1, %s736
        %s738 = smul.u32 2, %s36
        %p739 = scmp.lt.s32.totalorder %s37, 1
        %s740 = scalar_select %p739, %s37, 1
        %s741 = scalar_lea.vmem %s2, %s740
        %p742 = scmp.lt.s32.totalorder %s37, 1
        %s743 = scalar_select %p742, %s37, 1
        %s744 = scalar_lea.vmem %s3, %s743
        %p745 = scmp.lt.s32.totalorder %s37, 1
        %s746 = scalar_select %p745, %s37, 1
        %s747 = smul.addr %s746, 4
        %s748 = smul.addr %s747, 4
        %s749 = scalar_lea.vmem %s4, %s748
        %p750 = scmp.lt.s32.totalorder %s37, 1
        %s751 = scalar_select %p750, %s37, 1
        %s752 = scalar_lea.vmem %s5, %s751
        %p753 = scmp.lt.s32.totalorder %s37, 1
        %s754 = scalar_select %p753, %s37, 1
        %s755 = smul.addr %s754, 4
        %s756 = smul.addr %s755, 4
        %s757 = scalar_lea.vmem %s6, %s756
        %p758 = scmp.lt.s32.totalorder %s37, 1
        %s759 = scalar_select %p758, %s37, 1
        %s760 = scalar_lea.vmem %s7, %s759
        %p761 = scmp.lt.s32.totalorder %s37, 1
        %s762 = scalar_select %p761, %s37, 1
        %s763 = scalar_lea.vmem %s8, %s762
        %p764 = scmp.lt.s32.totalorder %s37, 1
        %s765 = scalar_select %p764, %s37, 1
        %s766 = smul.addr %s765, 4
        %s767 = smul.addr %s766, 4
        %s768 = scalar_lea.vmem %s10, %s767
        %p769 = scmp.lt.s32.totalorder %s37, 1
        %s770 = scalar_select %p769, %s37, 1
        %s771 = smul.addr %s770, 8
        %s772 = smul.addr %s771, 4
        %s773 = scalar_lea.vmem %s12, %s772
        %p774 = scmp.lt.s32.totalorder %s37, 1
        %s775 = scalar_select %p774, %s37, 1
        %s776 = scalar_lea.vmem %s13, %s775
        %s777 = smul.u32 2, %s36
        %p779 = scmp.eq.s32.totalorder %s37, 0
        // Predicated region
        $region97: #{tpu_custom_call.1} parent=83 // pred_check
          %p780 = pneg %p779
        $region98: #{tpu_custom_call.1} parent=83 // pred_check_branch
          %782 = sbr.rel (%p780) target = $region100
        $region99: #{tpu_custom_call.1} parent=83 // pred_region
          %v783 = vld [vmem:[#allocation4] sm:$0xf]
          %v784 = vld [vmem:[#allocation4 + $0x4] sm:$0xf]
          %v785 = vunpack.c.l.bf16 %v783
          %v786 = vunpack.c.l.bf16 %v784
          %vm787 = vcmask 261120
          %788 = vst.msk [vmem:[#allocation2] sm:$0xff] %vm787, %v785
          %789 = vst.msk [vmem:[#allocation2 + $0x8] sm:$0xff] %vm787, %v786
        $region100: #{tpu_custom_call.1} parent=83 // pred_fallthru
          _
        %v790 = vld [vmem:[#allocation2] sm:$0xff]
        %v791 = vld [vmem:[#allocation2 + $0x8] sm:$0xff]
        %v792 = vld [vmem:[%s737] sm:$0x1]
        %v793 = vld [vmem:[%s737 + $0x1] sm:$0x1]
        %v796 = vlaneseq
        %v797 = vshrl.u32 %v796, 7
        %v798 = vsub.s32 0, %v797
        %v799 = vrot.slane %v792, %v798
        %v800 = vlaneseq
        %v801 = vshrl.u32 %v800, 7
        %v802 = vsub.s32 0, %v801
        %v803 = vrot.slane %v793, %v802
        %v806 = vld [vmem:[%s741] sm:$0x1]
        %v807 = vld [vmem:[%s744] sm:$0x1]
        %vm808 = vcmask 261120
        %v809 = vsel %vm808, %v790, 0.0
        %810 = vadd.xlane.f32.xlu0 %v809
        %v811 = vpop.xlane.xlu0 %810
        %v812 = vsel %vm808, %v791, 0.0
        %813 = vadd.xlane.f32.xlu0 %v812
        %v814 = vpop.xlane.xlu0 %813
        %v815 = vrcp.pop 32.0
        %v816 = vmul.f32 %v811, %v815
        %v817 = vmul.f32 %v814, %v815
        %v818 = vmul.f32 %v790, %v790
        %v819 = vmul.f32 %v791, %v791
        %v820 = vsel %vm808, %v818, 0.0
        %821 = vadd.xlane.f32.xlu0 %v820
        %v822 = vpop.xlane.xlu0 %821
        %v823 = vsel %vm808, %v819, 0.0
        %824 = vadd.xlane.f32.xlu0 %v823
        %v825 = vpop.xlane.xlu0 %824
        %v826 = vmul.f32 %v822, %v815
        %v827 = vmul.f32 %v825, %v815
        %v828 = vmul.f32 %v816, %v816
        %v829 = vmul.f32 %v817, %v817
        %v830 = vsub.f32 %v826, %v828
        %v831 = vsub.f32 %v827, %v829
        %v832 = vmax.f32 %v830, 0.0
        %v833 = vmax.f32 %v831, 0.0
        %v834 = vsub.f32 %v790, %v816
        %v835 = vsub.f32 %v791, %v817
        %v836 = vadd.f32 %v832, 1e-06
        %v837 = vadd.f32 %v833, 1e-06
        %v838 = vrsqrt.pop %v836
        %v839 = vrsqrt.pop %v837
        %v840 = vmul.f32 %v834, %v838
        %v841 = vmul.f32 %v835, %v839
        %v843 = vlaneseq
        %v844 = vshrl.u32 %v843, 7
        %v845 = vsub.s32 0, %v844
        %v846 = vrot.slane %v806, %v845
        %v848 = vmul.f32 %v840, %v846
        %v849 = vmul.f32 %v841, %v846
        %v851 = vlaneseq
        %v852 = vshrl.u32 %v851, 7
        %v853 = vsub.s32 0, %v852
        %v854 = vrot.slane %v807, %v853
        %v856 = vadd.f32 %v848, %v854
        %v857 = vadd.f32 %v849, %v854
        %v858 = vpack.c.bf16 %v857, %v856
        %v859 = vld [vmem:[%s749] sm:$0xf]
        %v860 = vld [vmem:[%s749 + $0x4] sm:$0xf]
        %v861 = vld [vmem:[%s749 + $0x8] sm:$0xf]
        %v862 = vld [vmem:[%s749 + $0xc] sm:$0xf]
        %v863 = vld [vmem:[%s752] sm:$0x1]
        %v865 = vlaneseq
        %v866 = vshrl.u32 %v865, 7
        %v867 = vsub.s32 0, %v866
        %v868 = vrot.slane %v863, %v867
        %v874 = vunpack.c.l.b16 %v859
        %v875 = vunpack.c.l.b16 %v860
        %v876 = vunpack.c.l.b16 %v861
        %v877 = vunpack.c.l.b16 %v862
        %v878 = vpack.c.b16 %v875, %v874
        %v879 = vpack.c.b16 %v877, %v876
        %v883 = vsel %vm808, %v858, 0
        %885 = vmatprep.subr.bf16.mxu0 0
        %886 = vmatpush1.bf16.msra.mxu0 %v878
        %887 = vmatprep.subr.bf16.mxu0 0
        %888 = vmatpush1.bf16.msra.mxu0 %v879
        %889 = vmatprep.subr.bf16.mxu0 0
        %890 = vmatpush1.bf16.msra.mxu0 0
        %891 = vmatprep.subr.bf16.mxu0 0
        %892 = vmatpush1.bf16.msra.mxu0 0
        %893 = vmatprep.subr.bf16.mxu0 0
        %894 = vmatpush1.bf16.msra.mxu0 0
        %895 = vmatprep.subr.bf16.mxu0 0
        %896 = vmatpush1.bf16.msra.mxu0 0
        %897 = vmatprep.subr.bf16.mxu0 0
        %898 = vmatpush1.bf16.msra.mxu0 0
        %899 = vmatprep.subr.bf16.mxu0 0
        %900 = vmatpush1.bf16.msra.mxu0 0
        %901 = vmatprep.subr.bf16.mxu0 0
        %902 = vmatpush1.bf16.msra.mxu0 0
        %903 = vmatprep.subr.bf16.mxu0 0
        %904 = vmatpush1.bf16.msra.mxu0 0
        %905 = vmatprep.subr.bf16.mxu0 0
        %906 = vmatpush1.bf16.msra.mxu0 0
        %907 = vmatprep.subr.bf16.mxu0 0
        %908 = vmatpush1.bf16.msra.mxu0 0
        %909 = vmatprep.subr.bf16.mxu0 0
        %910 = vmatpush1.bf16.msra.mxu0 0
        %911 = vmatprep.subr.bf16.mxu0 0
        %912 = vmatpush1.bf16.msra.mxu0 0
        %913 = vmatprep.subr.bf16.mxu0 0
        %914 = vmatpush1.bf16.msra.mxu0 0
        %915 = vmatprep.subr.bf16.mxu0 0
        %916 = vmatpush1.bf16.msra.mxu0 0
        %917 = vmatprep.mubr.bf16.mxu0 0
        %918 = vmatmul.mubr.bf16.gmra.mrb[0].mxu0 %v883
        %v919 = vpop.f32.mrb[0].mxu0
        %v920 = vadd.f32 %v868, %v919
        %v921 = vpop.f32.mrb[0].mxu0
        %v922 = vpop.f32.mrb[0].mxu0
        %v923 = vadd.f32 %v868, %v922
        %v924 = vpop.f32.mrb[0].mxu0
        %925 = vdwg.mxu0
        %v926 = vpack.c.bf16 %v920, %v920
        %v927 = vpack.c.bf16 %v923, %v923
        %929 = vrot.lane.b32.xlu0 %v926, 96
        %v930 = vpop.permute.xlu0 %929
        %vm931 = vcmask 64512
        %v933 = vsel %vm931, %v926, 0
        %v936 = vsel %vm931, %v930, 0
        %938 = vmatprep.subr.bf16.mxu0 0
        %939 = vmatpush1.bf16.xpose.msra.mxu0 %v936
        %940 = vmatprep.subr.bf16.mxu0 0
        %941 = vmatpush1.bf16.xpose.msra.mxu0 0
        %942 = vmatprep.subr.bf16.mxu0 0
        %943 = vmatpush1.bf16.xpose.msra.mxu0 0
        %944 = vmatprep.subr.bf16.mxu0 0
        %945 = vmatpush1.bf16.xpose.msra.mxu0 0
        %946 = vmatprep.subr.bf16.mxu0 0
        %947 = vmatpush1.bf16.xpose.msra.mxu0 0
        %948 = vmatprep.subr.bf16.mxu0 0
        %949 = vmatpush1.bf16.xpose.msra.mxu0 0
        %950 = vmatprep.subr.bf16.mxu0 0
        %951 = vmatpush1.bf16.xpose.msra.mxu0 0
        %952 = vmatprep.subr.bf16.mxu0 0
        %953 = vmatpush1.bf16.xpose.msra.mxu0 0
        %954 = vmatprep.subr.bf16.mxu0 0
        %955 = vmatpush1.bf16.xpose.msra.mxu0 0
        %956 = vmatprep.subr.bf16.mxu0 0
        %957 = vmatpush1.bf16.xpose.msra.mxu0 0
        %958 = vmatprep.subr.bf16.mxu0 0
        %959 = vmatpush1.bf16.xpose.msra.mxu0 0
        %960 = vmatprep.subr.bf16.mxu0 0
        %961 = vmatpush1.bf16.xpose.msra.mxu0 0
        %962 = vmatprep.subr.bf16.mxu0 0
        %963 = vmatpush1.bf16.xpose.msra.mxu0 0
        %964 = vmatprep.subr.bf16.mxu0 0
        %965 = vmatpush1.bf16.xpose.msra.mxu0 0
        %966 = vmatprep.subr.bf16.mxu0 0
        %967 = vmatpush1.bf16.xpose.msra.mxu0 0
        %968 = vmatprep.subr.bf16.mxu0 0
        %969 = vmatpush1.bf16.xpose.msra.mxu0 0
        %970 = vmatprep.mubr.bf16.mxu0 0
        %971 = vmatmul.mubr.bf16.gmra.mrb[0].mxu0 %v933
        %v972 = vpop.f32.mrb[0].mxu0
        %v973 = vadd.f32 %v799, %v972
        %v974 = vpop.f32.mrb[0].mxu0
        %v975 = vpop.f32.mrb[0].mxu0
        %v976 = vpop.f32.mrb[0].mxu0
        %977 = vdwg.mxu0
        %979 = vrot.lane.b32.xlu0 %v927, 96
        %v980 = vpop.permute.xlu0 %979
        %v982 = vsel %vm931, %v927, 0
        %v985 = vsel %vm931, %v980, 0
        %987 = vmatprep.subr.bf16.mxu0 0
        %988 = vmatpush1.bf16.xpose.msra.mxu0 %v985
        %989 = vmatprep.subr.bf16.mxu0 0
        %990 = vmatpush1.bf16.xpose.msra.mxu0 0
        %991 = vmatprep.subr.bf16.mxu0 0
        %992 = vmatpush1.bf16.xpose.msra.mxu0 0
        %993 = vmatprep.subr.bf16.mxu0 0
        %994 = vmatpush1.bf16.xpose.msra.mxu0 0
        %995 = vmatprep.subr.bf16.mxu0 0
        %996 = vmatpush1.bf16.xpose.msra.mxu0 0
        %997 = vmatprep.subr.bf16.mxu0 0
        %998 = vmatpush1.bf16.xpose.msra.mxu0 0
        %999 = vmatprep.subr.bf16.mxu0 0
        %1000 = vmatpush1.bf16.xpose.msra.mxu0 0
        %1001 = vmatprep.subr.bf16.mxu0 0
        %1002 = vmatpush1.bf16.xpose.msra.mxu0 0
        %1003 = vmatprep.subr.bf16.mxu0 0
        %1004 = vmatpush1.bf16.xpose.msra.mxu0 0
        %1005 = vmatprep.subr.bf16.mxu0 0
        %1006 = vmatpush1.bf16.xpose.msra.mxu0 0
        %1007 = vmatprep.subr.bf16.mxu0 0
        %1008 = vmatpush1.bf16.xpose.msra.mxu0 0
        %1009 = vmatprep.subr.bf16.mxu0 0
        %1010 = vmatpush1.bf16.xpose.msra.mxu0 0
        %1011 = vmatprep.subr.bf16.mxu0 0
        %1012 = vmatpush1.bf16.xpose.msra.mxu0 0
        %1013 = vmatprep.subr.bf16.mxu0 0
        %1014 = vmatpush1.bf16.xpose.msra.mxu0 0
        %1015 = vmatprep.subr.bf16.mxu0 0
        %1016 = vmatpush1.bf16.xpose.msra.mxu0 0
        %1017 = vmatprep.subr.bf16.mxu0 0
        %1018 = vmatpush1.bf16.xpose.msra.mxu0 0
        %1019 = vmatprep.mubr.bf16.mxu0 0
        %1020 = vmatmul.mubr.bf16.gmra.mrb[0].mxu0 %v982
        %v1021 = vpop.f32.mrb[0].mxu0
        %v1022 = vadd.f32 %v803, %v1021
        %v1023 = vpop.f32.mrb[0].mxu0
        %v1024 = vpop.f32.mrb[0].mxu0
        %v1025 = vpop.f32.mrb[0].mxu0
        %1026 = vdwg.mxu0
        %v1027 = vsel %vm931, %v973, -inf
        %1028 = vmax.xlane.f32.xlu0 %v1027
        %v1029 = vpop.xlane.xlu0 %1028
        %v1030 = vsel %vm931, %v1022, -inf
        %1031 = vmax.xlane.f32.xlu0 %v1030
        %v1032 = vpop.xlane.xlu0 %1031
        %v1033 = vsub.f32 %v973, %v1029
        %v1034 = vsub.f32 %v1022, %v1032
        %v1035 = vmul.f32 %v1033, 1.442695
        %v1036 = vpow.pop %v1035
        %v1037 = vmul.f32 %v1034, 1.442695
        %v1038 = vpow.pop %v1037
        %v1039 = vsel %vm931, %v1036, 0.0
        %1040 = vadd.xlane.f32.xlu0 %v1039
        %v1041 = vpop.xlane.xlu0 %1040
        %v1042 = vsel %vm931, %v1038, 0.0
        %1043 = vadd.xlane.f32.xlu0 %v1042
        %v1044 = vpop.xlane.xlu0 %1043
        %v1045 = vrcp.pop %v1041
        %v1046 = vrcp.pop %v1044
        %v1047 = vmul.f32 %v1036, %v1045
        %v1048 = vmul.f32 %v1038, %v1046
        %v1049 = vpack.c.bf16 %v1047, %v1047
        %v1050 = vpack.c.bf16 %v1048, %v1048
        %1051 = vrot.lane.b32.xlu0 %v926, 64
        %v1052 = vpop.permute.xlu0 %1051
        %v1054 = vsel %vm931, %v1049, 0
        %vm1056 = vcmask 1043456
        %v1058 = vsel %vm1056, %v1052, 0
        %1060 = vmatprep.subr.bf16.mxu0 0
        %1061 = vmatpush1.bf16.msra.mxu0 %v1058
        %1062 = vmatprep.subr.bf16.mxu0 0
        %1063 = vmatpush1.bf16.msra.mxu0 0
        %1064 = vmatprep.subr.bf16.mxu0 0
        %1065 = vmatpush1.bf16.msra.mxu0 0
        %1066 = vmatprep.subr.bf16.mxu0 0
        %1067 = vmatpush1.bf16.msra.mxu0 0
        %1068 = vmatprep.subr.bf16.mxu0 0
        %1069 = vmatpush1.bf16.msra.mxu0 0
        %1070 = vmatprep.subr.bf16.mxu0 0
        %1071 = vmatpush1.bf16.msra.mxu0 0
        %1072 = vmatprep.subr.bf16.mxu0 0
        %1073 = vmatpush1.bf16.msra.mxu0 0
        %1074 = vmatprep.subr.bf16.mxu0 0
        %1075 = vmatpush1.bf16.msra.mxu0 0
        %1076 = vmatprep.subr.bf16.mxu0 0
        %1077 = vmatpush1.bf16.msra.mxu0 0
        %1078 = vmatprep.subr.bf16.mxu0 0
        %1079 = vmatpush1.bf16.msra.mxu0 0
        %1080 = vmatprep.subr.bf16.mxu0 0
        %1081 = vmatpush1.bf16.msra.mxu0 0
        %1082 = vmatprep.subr.bf16.mxu0 0
        %1083 = vmatpush1.bf16.msra.mxu0 0
        %1084 = vmatprep.subr.bf16.mxu0 0
        %1085 = vmatpush1.bf16.msra.mxu0 0
        %1086 = vmatprep.subr.bf16.mxu0 0
        %1087 = vmatpush1.bf16.msra.mxu0 0
        %1088 = vmatprep.subr.bf16.mxu0 0
        %1089 = vmatpush1.bf16.msra.mxu0 0
        %1090 = vmatprep.subr.bf16.mxu0 0
        %1091 = vmatpush1.bf16.msra.mxu0 0
        %1092 = vmatprep.mubr.bf16.mxu0 0
        %1093 = vmatmul.mubr.bf16.gmra.mrb[0].mxu0 %v1054
        %v1094 = vpop.f32.mrb[0].mxu0
        %v1095 = vadd.f32 0.0, %v1094
        %v1096 = vpop.f32.mrb[0].mxu0
        %v1097 = vpop.f32.mrb[0].mxu0
        %v1098 = vpop.f32.mrb[0].mxu0
        %1099 = vdwg.mxu0
        %1100 = vrot.lane.b32.xlu0 %v927, 64
        %v1101 = vpop.permute.xlu0 %1100
        %v1103 = vsel %vm931, %v1050, 0
        %v1106 = vsel %vm1056, %v1101, 0
        %1108 = vmatprep.subr.bf16.mxu0 0
        %1109 = vmatpush1.bf16.msra.mxu0 %v1106
        %1110 = vmatprep.subr.bf16.mxu0 0
        %1111 = vmatpush1.bf16.msra.mxu0 0
        %1112 = vmatprep.subr.bf16.mxu0 0
        %1113 = vmatpush1.bf16.msra.mxu0 0
        %1114 = vmatprep.subr.bf16.mxu0 0
        %1115 = vmatpush1.bf16.msra.mxu0 0
        %1116 = vmatprep.subr.bf16.mxu0 0
        %1117 = vmatpush1.bf16.msra.mxu0 0
        %1118 = vmatprep.subr.bf16.mxu0 0
        %1119 = vmatpush1.bf16.msra.mxu0 0
        %1120 = vmatprep.subr.bf16.mxu0 0
        %1121 = vmatpush1.bf16.msra.mxu0 0
        %1122 = vmatprep.subr.bf16.mxu0 0
        %1123 = vmatpush1.bf16.msra.mxu0 0
        %1124 = vmatprep.subr.bf16.mxu0 0
        %1125 = vmatpush1.bf16.msra.mxu0 0
        %1126 = vmatprep.subr.bf16.mxu0 0
        %1127 = vmatpush1.bf16.msra.mxu0 0
        %1128 = vmatprep.subr.bf16.mxu0 0
        %1129 = vmatpush1.bf16.msra.mxu0 0
        %1130 = vmatprep.subr.bf16.mxu0 0
        %1131 = vmatpush1.bf16.msra.mxu0 0
        %1132 = vmatprep.subr.bf16.mxu0 0
        %1133 = vmatpush1.bf16.msra.mxu0 0
        %1134 = vmatprep.subr.bf16.mxu0 0
        %1135 = vmatpush1.bf16.msra.mxu0 0
        %1136 = vmatprep.subr.bf16.mxu0 0
        %1137 = vmatpush1.bf16.msra.mxu0 0
        %1138 = vmatprep.subr.bf16.mxu0 0
        %1139 = vmatpush1.bf16.msra.mxu0 0
        %1140 = vmatprep.mubr.bf16.mxu0 0
        %1141 = vmatmul.mubr.bf16.gmra.mrb[0].mxu0 %v1103
        %v1142 = vpop.f32.mrb[0].mxu0
        %v1143 = vadd.f32 0.0, %v1142
        %v1144 = vpop.f32.mrb[0].mxu0
        %v1145 = vpop.f32.mrb[0].mxu0
        %v1146 = vpop.f32.mrb[0].mxu0
        %1147 = vdwg.mxu0
        %1148 = vst.msk [vmem:[#allocation3] sm:$0xff] %vm931, %v1095
        %1149 = vst.msk [vmem:[#allocation3 + $0x8] sm:$0xff] %vm931, %v1143
        %1150 = vrot.lane.b32.xlu0 %v926, 120
        %v1151 = vpop.permute.xlu0 %1150
        %1152 = vrot.lane.b32.xlu0 %v926, 88
        %v1153 = vpop.permute.xlu0 %1152
        %v1155 = vsel %vm931, %v1151, 0
        %v1158 = vsel %vm931, %v1153, 0
        %1160 = vmatprep.subr.bf16.mxu0 0
        %1161 = vmatpush1.bf16.xpose.msra.mxu0 %v1158
        %1162 = vmatprep.subr.bf16.mxu0 0
        %1163 = vmatpush1.bf16.xpose.msra.mxu0 0
        %1164 = vmatprep.subr.bf16.mxu0 0
        %1165 = vmatpush1.bf16.xpose.msra.mxu0 0
        %1166 = vmatprep.subr.bf16.mxu0 0
        %1167 = vmatpush1.bf16.xpose.msra.mxu0 0
        %1168 = vmatprep.subr.bf16.mxu0 0
        %1169 = vmatpush1.bf16.xpose.msra.mxu0 0
        %1170 = vmatprep.subr.bf16.mxu0 0
        %1171 = vmatpush1.bf16.xpose.msra.mxu0 0
        %1172 = vmatprep.subr.bf16.mxu0 0
        %1173 = vmatpush1.bf16.xpose.msra.mxu0 0
        %1174 = vmatprep.subr.bf16.mxu0 0
        %1175 = vmatpush1.bf16.xpose.msra.mxu0 0
        %1176 = vmatprep.subr.bf16.mxu0 0
        %1177 = vmatpush1.bf16.xpose.msra.mxu0 0
        %1178 = vmatprep.subr.bf16.mxu0 0
        %1179 = vmatpush1.bf16.xpose.msra.mxu0 0
        %1180 = vmatprep.subr.bf16.mxu0 0
        %1181 = vmatpush1.bf16.xpose.msra.mxu0 0
        %1182 = vmatprep.subr.bf16.mxu0 0
        %1183 = vmatpush1.bf16.xpose.msra.mxu0 0
        %1184 = vmatprep.subr.bf16.mxu0 0
        %1185 = vmatpush1.bf16.xpose.msra.mxu0 0
        %1186 = vmatprep.subr.bf16.mxu0 0
        %1187 = vmatpush1.bf16.xpose.msra.mxu0 0
        %1188 = vmatprep.subr.bf16.mxu0 0
        %1189 = vmatpush1.bf16.xpose.msra.mxu0 0
        %1190 = vmatprep.subr.bf16.mxu0 0
        %1191 = vmatpush1.bf16.xpose.msra.mxu0 0
        %1192 = vmatprep.mubr.bf16.mxu0 0
        %1193 = vmatmul.mubr.bf16.gmra.mrb[0].mxu0 %v1155
        %v1194 = vpop.f32.mrb[0].mxu0
        %v1195 = vadd.f32 %v799, %v1194
        %v1196 = vpop.f32.mrb[0].mxu0
        %v1197 = vpop.f32.mrb[0].mxu0
        %v1198 = vpop.f32.mrb[0].mxu0
        %1199 = vdwg.mxu0
        %1200 = vrot.lane.b32.xlu0 %v927, 120
        %v1201 = vpop.permute.xlu0 %1200
        %1202 = vrot.lane.b32.xlu0 %v927, 88
        %v1203 = vpop.permute.xlu0 %1202
        %v1205 = vsel %vm931, %v1201, 0
        %v1208 = vsel %vm931, %v1203, 0
        %1210 = vmatprep.subr.bf16.mxu0 0
        %1211 = vmatpush1.bf16.xpose.msra.mxu0 %v1208
        %1212 = vmatprep.subr.bf16.mxu0 0
        %1213 = vmatpush1.bf16.xpose.msra.mxu0 0
        %1214 = vmatprep.subr.bf16.mxu0 0
        %1215 = vmatpush1.bf16.xpose.msra.mxu0 0
        %1216 = vmatprep.subr.bf16.mxu0 0
        %1217 = vmatpush1.bf16.xpose.msra.mxu0 0
        %1218 = vmatprep.subr.bf16.mxu0 0
        %1219 = vmatpush1.bf16.xpose.msra.mxu0 0
        %1220 = vmatprep.subr.bf16.mxu0 0
        %1221 = vmatpush1.bf16.xpose.msra.mxu0 0
        %1222 = vmatprep.subr.bf16.mxu0 0
        %1223 = vmatpush1.bf16.xpose.msra.mxu0 0
        %1224 = vmatprep.subr.bf16.mxu0 0
        %1225 = vmatpush1.bf16.xpose.msra.mxu0 0
        %1226 = vmatprep.subr.bf16.mxu0 0
        %1227 = vmatpush1.bf16.xpose.msra.mxu0 0
        %1228 = vmatprep.subr.bf16.mxu0 0
        %1229 = vmatpush1.bf16.xpose.msra.mxu0 0
        %1230 = vmatprep.subr.bf16.mxu0 0
        %1231 = vmatpush1.bf16.xpose.msra.mxu0 0
        %1232 = vmatprep.subr.bf16.mxu0 0
        %1233 = vmatpush1.bf16.xpose.msra.mxu0 0
        %1234 = vmatprep.subr.bf16.mxu0 0
        %1235 = vmatpush1.bf16.xpose.msra.mxu0 0
        %1236 = vmatprep.subr.bf16.mxu0 0
        %1237 = vmatpush1.bf16.xpose.msra.mxu0 0
        %1238 = vmatprep.subr.bf16.mxu0 0
        %1239 = vmatpush1.bf16.xpose.msra.mxu0 0
        %1240 = vmatprep.subr.bf16.mxu0 0
        %1241 = vmatpush1.bf16.xpose.msra.mxu0 0
        %1242 = vmatprep.mubr.bf16.mxu0 0
        %1243 = vmatmul.mubr.bf16.gmra.mrb[0].mxu0 %v1205
        %v1244 = vpop.f32.mrb[0].mxu0
        %v1245 = vadd.f32 %v803, %v1244
        %v1246 = vpop.f32.mrb[0].mxu0
        %v1247 = vpop.f32.mrb[0].mxu0
        %v1248 = vpop.f32.mrb[0].mxu0
        %1249 = vdwg.mxu0
        %v1250 = vsel %vm931, %v1195, -inf
        %1251 = vmax.xlane.f32.xlu0 %v1250
        %v1252 = vpop.xlane.xlu0 %1251
        %v1253 = vsel %vm931, %v1245, -inf
        %1254 = vmax.xlane.f32.xlu0 %v1253
        %v1255 = vpop.xlane.xlu0 %1254
        %v1256 = vsub.f32 %v1195, %v1252
        %v1257 = vsub.f32 %v1245, %v1255
        %v1258 = vmul.f32 %v1256, 1.442695
        %v1259 = vpow.pop %v1258
        %v1260 = vmul.f32 %v1257, 1.442695
        %v1261 = vpow.pop %v1260
        %v1262 = vsel %vm931, %v1259, 0.0
        %1263 = vadd.xlane.f32.xlu0 %v1262
        %v1264 = vpop.xlane.xlu0 %1263
        %v1265 = vsel %vm931, %v1261, 0.0
        %1266 = vadd.xlane.f32.xlu0 %v1265
        %v1267 = vpop.xlane.xlu0 %1266
        %v1268 = vrcp.pop %v1264
        %v1269 = vrcp.pop %v1267
        %v1270 = vmul.f32 %v1259, %v1268
        %v1271 = vmul.f32 %v1261, %v1269
        %v1272 = vpack.c.bf16 %v1270, %v1270
        %v1273 = vpack.c.bf16 %v1271, %v1271
        %1274 = vrot.lane.b32.xlu0 %v926, 56
        %v1275 = vpop.permute.xlu0 %1274
        %v1277 = vsel %vm931, %v1272, 0
        %v1280 = vsel %vm1056, %v1275, 0
        %1282 = vmatprep.subr.bf16.mxu0 0
        %1283 = vmatpush1.bf16.msra.mxu0 %v1280
        %1284 = vmatprep.subr.bf16.mxu0 0
        %1285 = vmatpush1.bf16.msra.mxu0 0
        %1286 = vmatprep.subr.bf16.mxu0 0
        %1287 = vmatpush1.bf16.msra.mxu0 0
        %1288 = vmatprep.subr.bf16.mxu0 0
        %1289 = vmatpush1.bf16.msra.mxu0 0
        %1290 = vmatprep.subr.bf16.mxu0 0
        %1291 = vmatpush1.bf16.msra.mxu0 0
        %1292 = vmatprep.subr.bf16.mxu0 0
        %1293 = vmatpush1.bf16.msra.mxu0 0
        %1294 = vmatprep.subr.bf16.mxu0 0
        %1295 = vmatpush1.bf16.msra.mxu0 0
        %1296 = vmatprep.subr.bf16.mxu0 0
        %1297 = vmatpush1.bf16.msra.mxu0 0
        %1298 = vmatprep.subr.bf16.mxu0 0
        %1299 = vmatpush1.bf16.msra.mxu0 0
        %1300 = vmatprep.subr.bf16.mxu0 0
        %1301 = vmatpush1.bf16.msra.mxu0 0
        %1302 = vmatprep.subr.bf16.mxu0 0
        %1303 = vmatpush1.bf16.msra.mxu0 0
        %1304 = vmatprep.subr.bf16.mxu0 0
        %1305 = vmatpush1.bf16.msra.mxu0 0
        %1306 = vmatprep.subr.bf16.mxu0 0
        %1307 = vmatpush1.bf16.msra.mxu0 0
        %1308 = vmatprep.subr.bf16.mxu0 0
        %1309 = vmatpush1.bf16.msra.mxu0 0
        %1310 = vmatprep.subr.bf16.mxu0 0
        %1311 = vmatpush1.bf16.msra.mxu0 0
        %1312 = vmatprep.subr.bf16.mxu0 0
        %1313 = vmatpush1.bf16.msra.mxu0 0
        %1314 = vmatprep.mubr.bf16.mxu0 0
        %1315 = vmatmul.mubr.bf16.gmra.mrb[0].mxu0 %v1277
        %v1316 = vpop.f32.mrb[0].mxu0
        %v1317 = vadd.f32 0.0, %v1316
        %v1318 = vpop.f32.mrb[0].mxu0
        %v1319 = vpop.f32.mrb[0].mxu0
        %v1320 = vpop.f32.mrb[0].mxu0
        %1321 = vdwg.mxu0
        %1322 = vrot.lane.b32.xlu0 %v927, 56
        %v1323 = vpop.permute.xlu0 %1322
        %v1325 = vsel %vm931, %v1273, 0
        %v1328 = vsel %vm1056, %v1323, 0
        %1330 = vmatprep.subr.bf16.mxu0 0
        %1331 = vmatpush1.bf16.msra.mxu0 %v1328
        %1332 = vmatprep.subr.bf16.mxu0 0
        %1333 = vmatpush1.bf16.msra.mxu0 0
        %1334 = vmatprep.subr.bf16.mxu0 0
        %1335 = vmatpush1.bf16.msra.mxu0 0
        %1336 = vmatprep.subr.bf16.mxu0 0
        %1337 = vmatpush1.bf16.msra.mxu0 0
        %1338 = vmatprep.subr.bf16.mxu0 0
        %1339 = vmatpush1.bf16.msra.mxu0 0
        %1340 = vmatprep.subr.bf16.mxu0 0
        %1341 = vmatpush1.bf16.msra.mxu0 0
        %1342 = vmatprep.subr.bf16.mxu0 0
        %1343 = vmatpush1.bf16.msra.mxu0 0
        %1344 = vmatprep.subr.bf16.mxu0 0
        %1345 = vmatpush1.bf16.msra.mxu0 0
        %1346 = vmatprep.subr.bf16.mxu0 0
        %1347 = vmatpush1.bf16.msra.mxu0 0
        %1348 = vmatprep.subr.bf16.mxu0 0
        %1349 = vmatpush1.bf16.msra.mxu0 0
        %1350 = vmatprep.subr.bf16.mxu0 0
        %1351 = vmatpush1.bf16.msra.mxu0 0
        %1352 = vmatprep.subr.bf16.mxu0 0
        %1353 = vmatpush1.bf16.msra.mxu0 0
        %1354 = vmatprep.subr.bf16.mxu0 0
        %1355 = vmatpush1.bf16.msra.mxu0 0
        %1356 = vmatprep.subr.bf16.mxu0 0
        %1357 = vmatpush1.bf16.msra.mxu0 0
        %1358 = vmatprep.subr.bf16.mxu0 0
        %1359 = vmatpush1.bf16.msra.mxu0 0
        %1360 = vmatprep.subr.bf16.mxu0 0
        %1361 = vmatpush1.bf16.msra.mxu0 0
        %1362 = vmatprep.mubr.bf16.mxu0 0
        %1363 = vmatmul.mubr.bf16.gmra.mrb[0].mxu0 %v1325
        %v1364 = vpop.f32.mrb[0].mxu0
        %v1365 = vadd.f32 0.0, %v1364
        %v1366 = vpop.f32.mrb[0].mxu0
        %v1367 = vpop.f32.mrb[0].mxu0
        %v1368 = vpop.f32.mrb[0].mxu0
        %1369 = vdwg.mxu0
        %1372 = vrot.lane.b32.xlu0 %v1317, 8
        %v1373 = vpop.permute.xlu0 %1372
        %1374 = vrot.lane.b32.xlu0 %v1365, 8
        %v1375 = vpop.permute.xlu0 %1374
        %vm1378 = vcmask 130112
        %1379 = vst.msk [vmem:[#allocation3] sm:$0xff] %vm1378, %v1373
        %1380 = vst.msk [vmem:[#allocation3 + $0x8] sm:$0xff] %vm1378, %v1375
        %1381 = vrot.lane.b32.xlu0 %v926, 112
        %v1382 = vpop.permute.xlu0 %1381
        %1383 = vrot.lane.b32.xlu0 %v926, 80
        %v1384 = vpop.permute.xlu0 %1383
        %v1386 = vsel %vm931, %v1382, 0
        %v1389 = vsel %vm931, %v1384, 0
        %1391 = vmatprep.subr.bf16.mxu0 0
        %1392 = vmatpush1.bf16.xpose.msra.mxu0 %v1389
        %1393 = vmatprep.subr.bf16.mxu0 0
        %1394 = vmatpush1.bf16.xpose.msra.mxu0 0
        %1395 = vmatprep.subr.bf16.mxu0 0
        %1396 = vmatpush1.bf16.xpose.msra.mxu0 0
        %1397 = vmatprep.subr.bf16.mxu0 0
        %1398 = vmatpush1.bf16.xpose.msra.mxu0 0
        %1399 = vmatprep.subr.bf16.mxu0 0
        %1400 = vmatpush1.bf16.xpose.msra.mxu0 0
        %1401 = vmatprep.subr.bf16.mxu0 0
        %1402 = vmatpush1.bf16.xpose.msra.mxu0 0
        %1403 = vmatprep.subr.bf16.mxu0 0
        %1404 = vmatpush1.bf16.xpose.msra.mxu0 0
        %1405 = vmatprep.subr.bf16.mxu0 0
        %1406 = vmatpush1.bf16.xpose.msra.mxu0 0
        %1407 = vmatprep.subr.bf16.mxu0 0
        %1408 = vmatpush1.bf16.xpose.msra.mxu0 0
        %1409 = vmatprep.subr.bf16.mxu0 0
        %1410 = vmatpush1.bf16.xpose.msra.mxu0 0
        %1411 = vmatprep.subr.bf16.mxu0 0
        %1412 = vmatpush1.bf16.xpose.msra.mxu0 0
        %1413 = vmatprep.subr.bf16.mxu0 0
        %1414 = vmatpush1.bf16.xpose.msra.mxu0 0
        %1415 = vmatprep.subr.bf16.mxu0 0
        %1416 = vmatpush1.bf16.xpose.msra.mxu0 0
        %1417 = vmatprep.subr.bf16.mxu0 0
        %1418 = vmatpush1.bf16.xpose.msra.mxu0 0
        %1419 = vmatprep.subr.bf16.mxu0 0
        %1420 = vmatpush1.bf16.xpose.msra.mxu0 0
        %1421 = vmatprep.subr.bf16.mxu0 0
        %1422 = vmatpush1.bf16.xpose.msra.mxu0 0
        %1423 = vmatprep.mubr.bf16.mxu0 0
        %1424 = vmatmul.mubr.bf16.gmra.mrb[0].mxu0 %v1386
        %v1425 = vpop.f32.mrb[0].mxu0
        %v1426 = vadd.f32 %v799, %v1425
        %v1427 = vpop.f32.mrb[0].mxu0
        %v1428 = vpop.f32.mrb[0].mxu0
        %v1429 = vpop.f32.mrb[0].mxu0
        %1430 = vdwg.mxu0
        %1431 = vrot.lane.b32.xlu0 %v927, 112
        %v1432 = vpop.permute.xlu0 %1431
        %1433 = vrot.lane.b32.xlu0 %v927, 80
        %v1434 = vpop.permute.xlu0 %1433
        %v1436 = vsel %vm931, %v1432, 0
        %v1439 = vsel %vm931, %v1434, 0
        %1441 = vmatprep.subr.bf16.mxu0 0
        %1442 = vmatpush1.bf16.xpose.msra.mxu0 %v1439
        %1443 = vmatprep.subr.bf16.mxu0 0
        %1444 = vmatpush1.bf16.xpose.msra.mxu0 0
        %1445 = vmatprep.subr.bf16.mxu0 0
        %1446 = vmatpush1.bf16.xpose.msra.mxu0 0
        %1447 = vmatprep.subr.bf16.mxu0 0
        %1448 = vmatpush1.bf16.xpose.msra.mxu0 0
        %1449 = vmatprep.subr.bf16.mxu0 0
        %1450 = vmatpush1.bf16.xpose.msra.mxu0 0
        %1451 = vmatprep.subr.bf16.mxu0 0
        %1452 = vmatpush1.bf16.xpose.msra.mxu0 0
        %1453 = vmatprep.subr.bf16.mxu0 0
        %1454 = vmatpush1.bf16.xpose.msra.mxu0 0
        %1455 = vmatprep.subr.bf16.mxu0 0
        %1456 = vmatpush1.bf16.xpose.msra.mxu0 0
        %1457 = vmatprep.subr.bf16.mxu0 0
        %1458 = vmatpush1.bf16.xpose.msra.mxu0 0
        %1459 = vmatprep.subr.bf16.mxu0 0
        %1460 = vmatpush1.bf16.xpose.msra.mxu0 0
        %1461 = vmatprep.subr.bf16.mxu0 0
        %1462 = vmatpush1.bf16.xpose.msra.mxu0 0
        %1463 = vmatprep.subr.bf16.mxu0 0
        %1464 = vmatpush1.bf16.xpose.msra.mxu0 0
        %1465 = vmatprep.subr.bf16.mxu0 0
        %1466 = vmatpush1.bf16.xpose.msra.mxu0 0
        %1467 = vmatprep.subr.bf16.mxu0 0
        %1468 = vmatpush1.bf16.xpose.msra.mxu0 0
        %1469 = vmatprep.subr.bf16.mxu0 0
        %1470 = vmatpush1.bf16.xpose.msra.mxu0 0
        %1471 = vmatprep.subr.bf16.mxu0 0
        %1472 = vmatpush1.bf16.xpose.msra.mxu0 0
        %1473 = vmatprep.mubr.bf16.mxu0 0
        %1474 = vmatmul.mubr.bf16.gmra.mrb[0].mxu0 %v1436
        %v1475 = vpop.f32.mrb[0].mxu0
        %v1476 = vadd.f32 %v803, %v1475
        %v1477 = vpop.f32.mrb[0].mxu0
        %v1478 = vpop.f32.mrb[0].mxu0
        %v1479 = vpop.f32.mrb[0].mxu0
        %1480 = vdwg.mxu0
        %v1481 = vsel %vm931, %v1426, -inf
        %1482 = vmax.xlane.f32.xlu0 %v1481
        %v1483 = vpop.xlane.xlu0 %1482
        %v1484 = vsel %vm931, %v1476, -inf
        %1485 = vmax.xlane.f32.xlu0 %v1484
        %v1486 = vpop.xlane.xlu0 %1485
        %v1487 = vsub.f32 %v1426, %v1483
        %v1488 = vsub.f32 %v1476, %v1486
        %v1489 = vmul.f32 %v1487, 1.442695
        %v1490 = vpow.pop %v1489
        %v1491 = vmul.f32 %v1488, 1.442695
        %v1492 = vpow.pop %v1491
        %v1493 = vsel %vm931, %v1490, 0.0
        %1494 = vadd.xlane.f32.xlu0 %v1493
        %v1495 = vpop.xlane.xlu0 %1494
        %v1496 = vsel %vm931, %v1492, 0.0
        %1497 = vadd.xlane.f32.xlu0 %v1496
        %v1498 = vpop.xlane.xlu0 %1497
        %v1499 = vrcp.pop %v1495
        %v1500 = vrcp.pop %v1498
        %v1501 = vmul.f32 %v1490, %v1499
        %v1502 = vmul.f32 %v1492, %v1500
        %v1503 = vpack.c.bf16 %v1501, %v1501
        %v1504 = vpack.c.bf16 %v1502, %v1502
        %1505 = vrot.lane.b32.xlu0 %v926, 48
        %v1506 = vpop.permute.xlu0 %1505
        %v1508 = vsel %vm931, %v1503, 0
        %v1511 = vsel %vm1056, %v1506, 0
        %1513 = vmatprep.subr.bf16.mxu0 0
        %1514 = vmatpush1.bf16.msra.mxu0 %v1511
        %1515 = vmatprep.subr.bf16.mxu0 0
        %1516 = vmatpush1.bf16.msra.mxu0 0
        %1517 = vmatprep.subr.bf16.mxu0 0
        %1518 = vmatpush1.bf16.msra.mxu0 0
        %1519 = vmatprep.subr.bf16.mxu0 0
        %1520 = vmatpush1.bf16.msra.mxu0 0
        %1521 = vmatprep.subr.bf16.mxu0 0
        %1522 = vmatpush1.bf16.msra.mxu0 0
        %1523 = vmatprep.subr.bf16.mxu0 0
        %1524 = vmatpush1.bf16.msra.mxu0 0
        %1525 = vmatprep.subr.bf16.mxu0 0
        %1526 = vmatpush1.bf16.msra.mxu0 0
        %1527 = vmatprep.subr.bf16.mxu0 0
        %1528 = vmatpush1.bf16.msra.mxu0 0
        %1529 = vmatprep.subr.bf16.mxu0 0
        %1530 = vmatpush1.bf16.msra.mxu0 0
        %1531 = vmatprep.subr.bf16.mxu0 0
        %1532 = vmatpush1.bf16.msra.mxu0 0
        %1533 = vmatprep.subr.bf16.mxu0 0
        %1534 = vmatpush1.bf16.msra.mxu0 0
        %1535 = vmatprep.subr.bf16.mxu0 0
        %1536 = vmatpush1.bf16.msra.mxu0 0
        %1537 = vmatprep.subr.bf16.mxu0 0
        %1538 = vmatpush1.bf16.msra.mxu0 0
        %1539 = vmatprep.subr.bf16.mxu0 0
        %1540 = vmatpush1.bf16.msra.mxu0 0
        %1541 = vmatprep.subr.bf16.mxu0 0
        %1542 = vmatpush1.bf16.msra.mxu0 0
        %1543 = vmatprep.subr.bf16.mxu0 0
        %1544 = vmatpush1.bf16.msra.mxu0 0
        %1545 = vmatprep.mubr.bf16.mxu0 0
        %1546 = vmatmul.mubr.bf16.gmra.mrb[0].mxu0 %v1508
        %v1547 = vpop.f32.mrb[0].mxu0
        %v1548 = vadd.f32 0.0, %v1547
        %v1549 = vpop.f32.mrb[0].mxu0
        %v1550 = vpop.f32.mrb[0].mxu0
        %v1551 = vpop.f32.mrb[0].mxu0
        %1552 = vdwg.mxu0
        %1553 = vrot.lane.b32.xlu0 %v927, 48
        %v1554 = vpop.permute.xlu0 %1553
        %v1556 = vsel %vm931, %v1504, 0
        %v1559 = vsel %vm1056, %v1554, 0
        %1561 = vmatprep.subr.bf16.mxu0 0
        %1562 = vmatpush1.bf16.msra.mxu0 %v1559
        %1563 = vmatprep.subr.bf16.mxu0 0
        %1564 = vmatpush1.bf16.msra.mxu0 0
        %1565 = vmatprep.subr.bf16.mxu0 0
        %1566 = vmatpush1.bf16.msra.mxu0 0
        %1567 = vmatprep.subr.bf16.mxu0 0
        %1568 = vmatpush1.bf16.msra.mxu0 0
        %1569 = vmatprep.subr.bf16.mxu0 0
        %1570 = vmatpush1.bf16.msra.mxu0 0
        %1571 = vmatprep.subr.bf16.mxu0 0
        %1572 = vmatpush1.bf16.msra.mxu0 0
        %1573 = vmatprep.subr.bf16.mxu0 0
        %1574 = vmatpush1.bf16.msra.mxu0 0
        %1575 = vmatprep.subr.bf16.mxu0 0
        %1576 = vmatpush1.bf16.msra.mxu0 0
        %1577 = vmatprep.subr.bf16.mxu0 0
        %1578 = vmatpush1.bf16.msra.mxu0 0
        %1579 = vmatprep.subr.bf16.mxu0 0
        %1580 = vmatpush1.bf16.msra.mxu0 0
        %1581 = vmatprep.subr.bf16.mxu0 0
        %1582 = vmatpush1.bf16.msra.mxu0 0
        %1583 = vmatprep.subr.bf16.mxu0 0
        %1584 = vmatpush1.bf16.msra.mxu0 0
        %1585 = vmatprep.subr.bf16.mxu0 0
        %1586 = vmatpush1.bf16.msra.mxu0 0
        %1587 = vmatprep.subr.bf16.mxu0 0
        %1588 = vmatpush1.bf16.msra.mxu0 0
        %1589 = vmatprep.subr.bf16.mxu0 0
        %1590 = vmatpush1.bf16.msra.mxu0 0
        %1591 = vmatprep.subr.bf16.mxu0 0
        %1592 = vmatpush1.bf16.msra.mxu0 0
        %1593 = vmatprep.mubr.bf16.mxu0 0
        %1594 = vmatmul.mubr.bf16.gmra.mrb[0].mxu0 %v1556
        %v1595 = vpop.f32.mrb[0].mxu0
        %v1596 = vadd.f32 0.0, %v1595
        %v1597 = vpop.f32.mrb[0].mxu0
        %v1598 = vpop.f32.mrb[0].mxu0
        %v1599 = vpop.f32.mrb[0].mxu0
        %1600 = vdwg.mxu0
        %1603 = vrot.lane.b32.xlu0 %v1548, 16
        %v1604 = vpop.permute.xlu0 %1603
        %1605 = vrot.lane.b32.xlu0 %v1596, 16
        %v1606 = vpop.permute.xlu0 %1605
        %vm1609 = vcmask 195712
        %1610 = vst.msk [vmem:[#allocation3] sm:$0xff] %vm1609, %v1604
        %1611 = vst.msk [vmem:[#allocation3 + $0x8] sm:$0xff] %vm1609, %v1606
        %1612 = vrot.lane.b32.xlu0 %v926, 104
        %v1613 = vpop.permute.xlu0 %1612
        %1614 = vrot.lane.b32.xlu0 %v926, 72
        %v1615 = vpop.permute.xlu0 %1614
        %v1617 = vsel %vm931, %v1613, 0
        %v1620 = vsel %vm931, %v1615, 0
        %1622 = vmatprep.subr.bf16.mxu0 0
        %1623 = vmatpush1.bf16.xpose.msra.mxu0 %v1620
        %1624 = vmatprep.subr.bf16.mxu0 0
        %1625 = vmatpush1.bf16.xpose.msra.mxu0 0
        %1626 = vmatprep.subr.bf16.mxu0 0
        %1627 = vmatpush1.bf16.xpose.msra.mxu0 0
        %1628 = vmatprep.subr.bf16.mxu0 0
        %1629 = vmatpush1.bf16.xpose.msra.mxu0 0
        %1630 = vmatprep.subr.bf16.mxu0 0
        %1631 = vmatpush1.bf16.xpose.msra.mxu0 0
        %1632 = vmatprep.subr.bf16.mxu0 0
        %1633 = vmatpush1.bf16.xpose.msra.mxu0 0
        %1634 = vmatprep.subr.bf16.mxu0 0
        %1635 = vmatpush1.bf16.xpose.msra.mxu0 0
        %1636 = vmatprep.subr.bf16.mxu0 0
        %1637 = vmatpush1.bf16.xpose.msra.mxu0 0
        %1638 = vmatprep.subr.bf16.mxu0 0
        %1639 = vmatpush1.bf16.xpose.msra.mxu0 0
        %1640 = vmatprep.subr.bf16.mxu0 0
        %1641 = vmatpush1.bf16.xpose.msra.mxu0 0
        %1642 = vmatprep.subr.bf16.mxu0 0
        %1643 = vmatpush1.bf16.xpose.msra.mxu0 0
        %1644 = vmatprep.subr.bf16.mxu0 0
        %1645 = vmatpush1.bf16.xpose.msra.mxu0 0
        %1646 = vmatprep.subr.bf16.mxu0 0
        %1647 = vmatpush1.bf16.xpose.msra.mxu0 0
        %1648 = vmatprep.subr.bf16.mxu0 0
        %1649 = vmatpush1.bf16.xpose.msra.mxu0 0
        %1650 = vmatprep.subr.bf16.mxu0 0
        %1651 = vmatpush1.bf16.xpose.msra.mxu0 0
        %1652 = vmatprep.subr.bf16.mxu0 0
        %1653 = vmatpush1.bf16.xpose.msra.mxu0 0
        %1654 = vmatprep.mubr.bf16.mxu0 0
        %1655 = vmatmul.mubr.bf16.gmra.mrb[0].mxu0 %v1617
        %v1656 = vpop.f32.mrb[0].mxu0
        %v1657 = vadd.f32 %v799, %v1656
        %v1658 = vpop.f32.mrb[0].mxu0
        %v1659 = vpop.f32.mrb[0].mxu0
        %v1660 = vpop.f32.mrb[0].mxu0
        %1661 = vdwg.mxu0
        %1662 = vrot.lane.b32.xlu0 %v927, 104
        %v1663 = vpop.permute.xlu0 %1662
        %1664 = vrot.lane.b32.xlu0 %v927, 72
        %v1665 = vpop.permute.xlu0 %1664
        %v1667 = vsel %vm931, %v1663, 0
        %v1670 = vsel %vm931, %v1665, 0
        %1672 = vmatprep.subr.bf16.mxu0 0
        %1673 = vmatpush1.bf16.xpose.msra.mxu0 %v1670
        %1674 = vmatprep.subr.bf16.mxu0 0
        %1675 = vmatpush1.bf16.xpose.msra.mxu0 0
        %1676 = vmatprep.subr.bf16.mxu0 0
        %1677 = vmatpush1.bf16.xpose.msra.mxu0 0
        %1678 = vmatprep.subr.bf16.mxu0 0
        %1679 = vmatpush1.bf16.xpose.msra.mxu0 0
        %1680 = vmatprep.subr.bf16.mxu0 0
        %1681 = vmatpush1.bf16.xpose.msra.mxu0 0
        %1682 = vmatprep.subr.bf16.mxu0 0
        %1683 = vmatpush1.bf16.xpose.msra.mxu0 0
        %1684 = vmatprep.subr.bf16.mxu0 0
        %1685 = vmatpush1.bf16.xpose.msra.mxu0 0
        %1686 = vmatprep.subr.bf16.mxu0 0
        %1687 = vmatpush1.bf16.xpose.msra.mxu0 0
        %1688 = vmatprep.subr.bf16.mxu0 0
        %1689 = vmatpush1.bf16.xpose.msra.mxu0 0
        %1690 = vmatprep.subr.bf16.mxu0 0
        %1691 = vmatpush1.bf16.xpose.msra.mxu0 0
        %1692 = vmatprep.subr.bf16.mxu0 0
        %1693 = vmatpush1.bf16.xpose.msra.mxu0 0
        %1694 = vmatprep.subr.bf16.mxu0 0
        %1695 = vmatpush1.bf16.xpose.msra.mxu0 0
        %1696 = vmatprep.subr.bf16.mxu0 0
        %1697 = vmatpush1.bf16.xpose.msra.mxu0 0
        %1698 = vmatprep.subr.bf16.mxu0 0
        %1699 = vmatpush1.bf16.xpose.msra.mxu0 0
        %1700 = vmatprep.subr.bf16.mxu0 0
        %1701 = vmatpush1.bf16.xpose.msra.mxu0 0
        %1702 = vmatprep.subr.bf16.mxu0 0
        %1703 = vmatpush1.bf16.xpose.msra.mxu0 0
        %1704 = vmatprep.mubr.bf16.mxu0 0
        %1705 = vmatmul.mubr.bf16.gmra.mrb[0].mxu0 %v1667
        %v1706 = vpop.f32.mrb[0].mxu0
        %v1707 = vadd.f32 %v803, %v1706
        %v1708 = vpop.f32.mrb[0].mxu0
        %v1709 = vpop.f32.mrb[0].mxu0
        %v1710 = vpop.f32.mrb[0].mxu0
        %1711 = vdwg.mxu0
        %v1712 = vsel %vm931, %v1657, -inf
        %1713 = vmax.xlane.f32.xlu0 %v1712
        %v1714 = vpop.xlane.xlu0 %1713
        %v1715 = vsel %vm931, %v1707, -inf
        %1716 = vmax.xlane.f32.xlu0 %v1715
        %v1717 = vpop.xlane.xlu0 %1716
        %v1718 = vsub.f32 %v1657, %v1714
        %v1719 = vsub.f32 %v1707, %v1717
        %v1720 = vmul.f32 %v1718, 1.442695
        %v1721 = vpow.pop %v1720
        %v1722 = vmul.f32 %v1719, 1.442695
        %v1723 = vpow.pop %v1722
        %v1724 = vsel %vm931, %v1721, 0.0
        %1725 = vadd.xlane.f32.xlu0 %v1724
        %v1726 = vpop.xlane.xlu0 %1725
        %v1727 = vsel %vm931, %v1723, 0.0
        %1728 = vadd.xlane.f32.xlu0 %v1727
        %v1729 = vpop.xlane.xlu0 %1728
        %v1730 = vrcp.pop %v1726
        %v1731 = vrcp.pop %v1729
        %v1732 = vmul.f32 %v1721, %v1730
        %v1733 = vmul.f32 %v1723, %v1731
        %v1734 = vpack.c.bf16 %v1732, %v1732
        %v1735 = vpack.c.bf16 %v1733, %v1733
        %1736 = vrot.lane.b32.xlu0 %v926, 40
        %v1737 = vpop.permute.xlu0 %1736
        %v1739 = vsel %vm931, %v1734, 0
        %v1742 = vsel %vm1056, %v1737, 0
        %1744 = vmatprep.subr.bf16.mxu0 0
        %1745 = vmatpush1.bf16.msra.mxu0 %v1742
        %1746 = vmatprep.subr.bf16.mxu0 0
        %1747 = vmatpush1.bf16.msra.mxu0 0
        %1748 = vmatprep.subr.bf16.mxu0 0
        %1749 = vmatpush1.bf16.msra.mxu0 0
        %1750 = vmatprep.subr.bf16.mxu0 0
        %1751 = vmatpush1.bf16.msra.mxu0 0
        %1752 = vmatprep.subr.bf16.mxu0 0
        %1753 = vmatpush1.bf16.msra.mxu0 0
        %1754 = vmatprep.subr.bf16.mxu0 0
        %1755 = vmatpush1.bf16.msra.mxu0 0
        %1756 = vmatprep.subr.bf16.mxu0 0
        %1757 = vmatpush1.bf16.msra.mxu0 0
        %1758 = vmatprep.subr.bf16.mxu0 0
        %1759 = vmatpush1.bf16.msra.mxu0 0
        %1760 = vmatprep.subr.bf16.mxu0 0
        %1761 = vmatpush1.bf16.msra.mxu0 0
        %1762 = vmatprep.subr.bf16.mxu0 0
        %1763 = vmatpush1.bf16.msra.mxu0 0
        %1764 = vmatprep.subr.bf16.mxu0 0
        %1765 = vmatpush1.bf16.msra.mxu0 0
        %1766 = vmatprep.subr.bf16.mxu0 0
        %1767 = vmatpush1.bf16.msra.mxu0 0
        %1768 = vmatprep.subr.bf16.mxu0 0
        %1769 = vmatpush1.bf16.msra.mxu0 0
        %1770 = vmatprep.subr.bf16.mxu0 0
        %1771 = vmatpush1.bf16.msra.mxu0 0
        %1772 = vmatprep.subr.bf16.mxu0 0
        %1773 = vmatpush1.bf16.msra.mxu0 0
        %1774 = vmatprep.subr.bf16.mxu0 0
        %1775 = vmatpush1.bf16.msra.mxu0 0
        %1776 = vmatprep.mubr.bf16.mxu0 0
        %1777 = vmatmul.mubr.bf16.gmra.mrb[0].mxu0 %v1739
        %v1778 = vpop.f32.mrb[0].mxu0
        %v1779 = vadd.f32 0.0, %v1778
        %v1780 = vpop.f32.mrb[0].mxu0
        %v1781 = vpop.f32.mrb[0].mxu0
        %v1782 = vpop.f32.mrb[0].mxu0
        %1783 = vdwg.mxu0
        %1784 = vrot.lane.b32.xlu0 %v927, 40
        %v1785 = vpop.permute.xlu0 %1784
        %v1787 = vsel %vm931, %v1735, 0
        %v1790 = vsel %vm1056, %v1785, 0
        %1792 = vmatprep.subr.bf16.mxu0 0
        %1793 = vmatpush1.bf16.msra.mxu0 %v1790
        %1794 = vmatprep.subr.bf16.mxu0 0
        %1795 = vmatpush1.bf16.msra.mxu0 0
        %1796 = vmatprep.subr.bf16.mxu0 0
        %1797 = vmatpush1.bf16.msra.mxu0 0
        %1798 = vmatprep.subr.bf16.mxu0 0
        %1799 = vmatpush1.bf16.msra.mxu0 0
        %1800 = vmatprep.subr.bf16.mxu0 0
        %1801 = vmatpush1.bf16.msra.mxu0 0
        %1802 = vmatprep.subr.bf16.mxu0 0
        %1803 = vmatpush1.bf16.msra.mxu0 0
        %1804 = vmatprep.subr.bf16.mxu0 0
        %1805 = vmatpush1.bf16.msra.mxu0 0
        %1806 = vmatprep.subr.bf16.mxu0 0
        %1807 = vmatpush1.bf16.msra.mxu0 0
        %1808 = vmatprep.subr.bf16.mxu0 0
        %1809 = vmatpush1.bf16.msra.mxu0 0
        %1810 = vmatprep.subr.bf16.mxu0 0
        %1811 = vmatpush1.bf16.msra.mxu0 0
        %1812 = vmatprep.subr.bf16.mxu0 0
        %1813 = vmatpush1.bf16.msra.mxu0 0
        %1814 = vmatprep.subr.bf16.mxu0 0
        %1815 = vmatpush1.bf16.msra.mxu0 0
        %1816 = vmatprep.subr.bf16.mxu0 0
        %1817 = vmatpush1.bf16.msra.mxu0 0
        %1818 = vmatprep.subr.bf16.mxu0 0
        %1819 = vmatpush1.bf16.msra.mxu0 0
        %1820 = vmatprep.subr.bf16.mxu0 0
        %1821 = vmatpush1.bf16.msra.mxu0 0
        %1822 = vmatprep.subr.bf16.mxu0 0
        %1823 = vmatpush1.bf16.msra.mxu0 0
        %1824 = vmatprep.mubr.bf16.mxu0 0
        %1825 = vmatmul.mubr.bf16.gmra.mrb[0].mxu0 %v1787
        %v1826 = vpop.f32.mrb[0].mxu0
        %v1827 = vadd.f32 0.0, %v1826
        %v1828 = vpop.f32.mrb[0].mxu0
        %v1829 = vpop.f32.mrb[0].mxu0
        %v1830 = vpop.f32.mrb[0].mxu0
        %1831 = vdwg.mxu0
        %1834 = vrot.lane.b32.xlu0 %v1779, 24
        %v1835 = vpop.permute.xlu0 %1834
        %1836 = vrot.lane.b32.xlu0 %v1827, 24
        %v1837 = vpop.permute.xlu0 %1836
        %vm1840 = vcmask 261312
        %1841 = vst.msk [vmem:[#allocation3] sm:$0xff] %vm1840, %v1835
        %1842 = vst.msk [vmem:[#allocation3 + $0x8] sm:$0xff] %vm1840, %v1837
        %v1843 = vld [vmem:[#allocation3] sm:$0xff]
        %v1844 = vld [vmem:[#allocation3 + $0x8] sm:$0xff]
        %v1845 = vpack.c.bf16 %v1844, %v1843
        %v1846 = vld [vmem:[%s757] sm:$0xf]
        %v1847 = vld [vmem:[%s757 + $0x4] sm:$0xf]
        %v1848 = vld [vmem:[%s757 + $0x8] sm:$0xf]
        %v1849 = vld [vmem:[%s757 + $0xc] sm:$0xf]
        %v1850 = vld [vmem:[%s760] sm:$0x1]
        %v1852 = vlaneseq
        %v1853 = vshrl.u32 %v1852, 7
        %v1854 = vsub.s32 0, %v1853
        %v1855 = vrot.slane %v1850, %v1854
        %v1861 = vunpack.c.l.b16 %v1846
        %v1862 = vunpack.c.l.b16 %v1847
        %v1863 = vunpack.c.l.b16 %v1848
        %v1864 = vunpack.c.l.b16 %v1849
        %v1865 = vpack.c.b16 %v1862, %v1861
        %v1866 = vpack.c.b16 %v1864, %v1863
        %v1870 = vsel %vm808, %v1845, 0
        %1872 = vmatprep.subr.bf16.mxu0 0
        %1873 = vmatpush1.bf16.msra.mxu0 %v1865
        %1874 = vmatprep.subr.bf16.mxu0 0
        %1875 = vmatpush1.bf16.msra.mxu0 %v1866
        %1876 = vmatprep.subr.bf16.mxu0 0
        %1877 = vmatpush1.bf16.msra.mxu0 0
        %1878 = vmatprep.subr.bf16.mxu0 0
        %1879 = vmatpush1.bf16.msra.mxu0 0
        %1880 = vmatprep.subr.bf16.mxu0 0
        %1881 = vmatpush1.bf16.msra.mxu0 0
        %1882 = vmatprep.subr.bf16.mxu0 0
        %1883 = vmatpush1.bf16.msra.mxu0 0
        %1884 = vmatprep.subr.bf16.mxu0 0
        %1885 = vmatpush1.bf16.msra.mxu0 0
        %1886 = vmatprep.subr.bf16.mxu0 0
        %1887 = vmatpush1.bf16.msra.mxu0 0
        %1888 = vmatprep.subr.bf16.mxu0 0
        %1889 = vmatpush1.bf16.msra.mxu0 0
        %1890 = vmatprep.subr.bf16.mxu0 0
        %1891 = vmatpush1.bf16.msra.mxu0 0
        %1892 = vmatprep.subr.bf16.mxu0 0
        %1893 = vmatpush1.bf16.msra.mxu0 0
        %1894 = vmatprep.subr.bf16.mxu0 0
        %1895 = vmatpush1.bf16.msra.mxu0 0
        %1896 = vmatprep.subr.bf16.mxu0 0
        %1897 = vmatpush1.bf16.msra.mxu0 0
        %1898 = vmatprep.subr.bf16.mxu0 0
        %1899 = vmatpush1.bf16.msra.mxu0 0
        %1900 = vmatprep.subr.bf16.mxu0 0
        %1901 = vmatpush1.bf16.msra.mxu0 0
        %1902 = vmatprep.subr.bf16.mxu0 0
        %1903 = vmatpush1.bf16.msra.mxu0 0
        %1904 = vmatprep.mubr.bf16.mxu0 0
        %1905 = vmatmul.mubr.bf16.gmra.mrb[0].mxu0 %v1870
        %v1906 = vpop.f32.mrb[0].mxu0
        %v1907 = vadd.f32 %v1855, %v1906
        %v1908 = vpop.f32.mrb[0].mxu0
        %v1909 = vpop.f32.mrb[0].mxu0
        %v1910 = vadd.f32 %v1855, %v1909
        %v1911 = vpop.f32.mrb[0].mxu0
        %1912 = vdwg.mxu0
        %v1913 = vadd.f32 %v1907, %v790
        %v1914 = vadd.f32 %v1910, %v791
        %v1915 = vld [vmem:[%s763] sm:$0x1]
        %v1916 = vld [vmem:[%s636] sm:$0x1]
        %v1917 = vsel %vm808, %v1913, 0.0
        %1918 = vadd.xlane.f32.xlu0 %v1917
        %v1919 = vpop.xlane.xlu0 %1918
        %v1920 = vsel %vm808, %v1914, 0.0
        %1921 = vadd.xlane.f32.xlu0 %v1920
        %v1922 = vpop.xlane.xlu0 %1921
        %v1923 = vmul.f32 %v1919, %v815
        %v1924 = vmul.f32 %v1922, %v815
        %v1925 = vmul.f32 %v1913, %v1913
        %v1926 = vmul.f32 %v1914, %v1914
        %v1927 = vsel %vm808, %v1925, 0.0
        %1928 = vadd.xlane.f32.xlu0 %v1927
        %v1929 = vpop.xlane.xlu0 %1928
        %v1930 = vsel %vm808, %v1926, 0.0
        %1931 = vadd.xlane.f32.xlu0 %v1930
        %v1932 = vpop.xlane.xlu0 %1931
        %v1933 = vmul.f32 %v1929, %v815
        %v1934 = vmul.f32 %v1932, %v815
        %v1935 = vmul.f32 %v1923, %v1923
        %v1936 = vmul.f32 %v1924, %v1924
        %v1937 = vsub.f32 %v1933, %v1935
        %v1938 = vsub.f32 %v1934, %v1936
        %v1939 = vmax.f32 %v1937, 0.0
        %v1940 = vmax.f32 %v1938, 0.0
        %v1941 = vsub.f32 %v1913, %v1923
        %v1942 = vsub.f32 %v1914, %v1924
        %v1943 = vadd.f32 %v1939, 1e-06
        %v1944 = vadd.f32 %v1940, 1e-06
        %v1945 = vrsqrt.pop %v1943
        %v1946 = vrsqrt.pop %v1944
        %v1947 = vmul.f32 %v1941, %v1945
        %v1948 = vmul.f32 %v1942, %v1946
        %v1950 = vlaneseq
        %v1951 = vshrl.u32 %v1950, 7
        %v1952 = vsub.s32 0, %v1951
        %v1953 = vrot.slane %v1915, %v1952
        %v1955 = vmul.f32 %v1947, %v1953
        %v1956 = vmul.f32 %v1948, %v1953
        %v1958 = vlaneseq
        %v1959 = vshrl.u32 %v1958, 7
        %v1960 = vsub.s32 0, %v1959
        %v1961 = vrot.slane %v1916, %v1960
        %v1963 = vadd.f32 %v1955, %v1961
        %v1964 = vadd.f32 %v1956, %v1961
        %v1965 = vpack.c.bf16 %v1964, %v1963
        %v1966 = vld [vmem:[%s768] sm:$0xf]
        %v1967 = vld [vmem:[%s768 + $0x4] sm:$0xf]
        %v1968 = vld [vmem:[%s768 + $0x8] sm:$0xf]
        %v1969 = vld [vmem:[%s768 + $0xc] sm:$0xf]
        %v1970 = vld [vmem:[%s644] sm:$0x1]
        %v1972 = vlaneseq
        %v1973 = vshrl.u32 %v1972, 7
        %v1974 = vsub.s32 0, %v1973
        %v1975 = vrot.slane %v1970, %v1974
        %v1981 = vunpack.c.l.b16 %v1966
        %v1982 = vunpack.c.l.b16 %v1967
        %v1983 = vunpack.c.l.b16 %v1968
        %v1984 = vunpack.c.l.b16 %v1969
        %v1985 = vpack.c.b16 %v1982, %v1981
        %v1986 = vpack.c.b16 %v1984, %v1983
        %v1990 = vsel %vm808, %v1965, 0
        %1992 = vmatprep.subr.bf16.mxu0 0
        %1993 = vmatpush1.bf16.msra.mxu0 %v1985
        %1994 = vmatprep.subr.bf16.mxu0 0
        %1995 = vmatpush1.bf16.msra.mxu0 %v1986
        %1996 = vmatprep.subr.bf16.mxu0 0
        %1997 = vmatpush1.bf16.msra.mxu0 0
        %1998 = vmatprep.subr.bf16.mxu0 0
        %1999 = vmatpush1.bf16.msra.mxu0 0
        %2000 = vmatprep.subr.bf16.mxu0 0
        %2001 = vmatpush1.bf16.msra.mxu0 0
        %2002 = vmatprep.subr.bf16.mxu0 0
        %2003 = vmatpush1.bf16.msra.mxu0 0
        %2004 = vmatprep.subr.bf16.mxu0 0
        %2005 = vmatpush1.bf16.msra.mxu0 0
        %2006 = vmatprep.subr.bf16.mxu0 0
        %2007 = vmatpush1.bf16.msra.mxu0 0
        %2008 = vmatprep.subr.bf16.mxu0 0
        %2009 = vmatpush1.bf16.msra.mxu0 0
        %2010 = vmatprep.subr.bf16.mxu0 0
        %2011 = vmatpush1.bf16.msra.mxu0 0
        %2012 = vmatprep.subr.bf16.mxu0 0
        %2013 = vmatpush1.bf16.msra.mxu0 0
        %2014 = vmatprep.subr.bf16.mxu0 0
        %2015 = vmatpush1.bf16.msra.mxu0 0
        %2016 = vmatprep.subr.bf16.mxu0 0
        %2017 = vmatpush1.bf16.msra.mxu0 0
        %2018 = vmatprep.subr.bf16.mxu0 0
        %2019 = vmatpush1.bf16.msra.mxu0 0
        %2020 = vmatprep.subr.bf16.mxu0 0
        %2021 = vmatpush1.bf16.msra.mxu0 0
        %2022 = vmatprep.subr.bf16.mxu0 0
        %2023 = vmatpush1.bf16.msra.mxu0 0
        %2024 = vmatprep.mubr.bf16.mxu0 0
        %2025 = vmatmul.mubr.bf16.gmra.mrb[0].mxu0 %v1990
        %v2026 = vpop.f32.mrb[0].mxu0
        %v2027 = vadd.f32 %v1975, %v2026
        %v2028 = vpop.f32.mrb[0].mxu0
        %v2029 = vpop.f32.mrb[0].mxu0
        %v2030 = vadd.f32 %v1975, %v2029
        %v2031 = vpop.f32.mrb[0].mxu0
        %2032 = vdwg.mxu0
        %v2033 = vmax.f32 %v2027, 0.0
        %v2034 = vmax.f32 %v2030, 0.0
        %v2035 = vpack.c.bf16 %v2034, %v2033
        %v2036 = vld [vmem:[%s773] sm:$0xf]
        %v2037 = vld [vmem:[%s773 + $0x4] sm:$0xf]
        %v2038 = vld [vmem:[%s773 + $0x8] sm:$0xf]
        %v2039 = vld [vmem:[%s773 + $0xc] sm:$0xf]
        %v2040 = vld [vmem:[%s773 + $0x10] sm:$0xf]
        %v2041 = vld [vmem:[%s773 + $0x14] sm:$0xf]
        %v2042 = vld [vmem:[%s773 + $0x18] sm:$0xf]
        %v2043 = vld [vmem:[%s773 + $0x1c] sm:$0xf]
        %v2044 = vld [vmem:[%s776] sm:$0x1]
        %v2046 = vlaneseq
        %v2047 = vshrl.u32 %v2046, 7
        %v2048 = vsub.s32 0, %v2047
        %v2049 = vrot.slane %v2044, %v2048
        %v2059 = vunpack.c.l.b16 %v2036
        %v2060 = vunpack.c.l.b16 %v2037
        %v2061 = vunpack.c.l.b16 %v2038
        %v2062 = vunpack.c.l.b16 %v2039
        %v2063 = vunpack.c.l.b16 %v2040
        %v2064 = vunpack.c.l.b16 %v2041
        %v2065 = vunpack.c.l.b16 %v2042
        %v2066 = vunpack.c.l.b16 %v2043
        %v2067 = vpack.c.b16 %v2060, %v2059
        %v2068 = vpack.c.b16 %v2062, %v2061
        %v2069 = vpack.c.b16 %v2064, %v2063
        %v2070 = vpack.c.b16 %v2066, %v2065
        %vm2075 = vcmask 523264
        %v2077 = vsel %vm2075, %v2035, 0
        %2079 = vmatprep.subr.bf16.mxu0 0
        %2080 = vmatpush1.bf16.msra.mxu0 %v2067
        %2081 = vmatprep.subr.bf16.mxu0 0
        %2082 = vmatpush1.bf16.msra.mxu0 %v2068
        %2083 = vmatprep.subr.bf16.mxu0 0
        %2084 = vmatpush1.bf16.msra.mxu0 %v2069
        %2085 = vmatprep.subr.bf16.mxu0 0
        %2086 = vmatpush1.bf16.msra.mxu0 %v2070
        %2087 = vmatprep.subr.bf16.mxu0 0
        %2088 = vmatpush1.bf16.msra.mxu0 0
        %2089 = vmatprep.subr.bf16.mxu0 0
        %2090 = vmatpush1.bf16.msra.mxu0 0
        %2091 = vmatprep.subr.bf16.mxu0 0
        %2092 = vmatpush1.bf16.msra.mxu0 0
        %2093 = vmatprep.subr.bf16.mxu0 0
        %2094 = vmatpush1.bf16.msra.mxu0 0
        %2095 = vmatprep.subr.bf16.mxu0 0
        %2096 = vmatpush1.bf16.msra.mxu0 0
        %2097 = vmatprep.subr.bf16.mxu0 0
        %2098 = vmatpush1.bf16.msra.mxu0 0
        %2099 = vmatprep.subr.bf16.mxu0 0
        %2100 = vmatpush1.bf16.msra.mxu0 0
        %2101 = vmatprep.subr.bf16.mxu0 0
        %2102 = vmatpush1.bf16.msra.mxu0 0
        %2103 = vmatprep.subr.bf16.mxu0 0
        %2104 = vmatpush1.bf16.msra.mxu0 0
        %2105 = vmatprep.subr.bf16.mxu0 0
        %2106 = vmatpush1.bf16.msra.mxu0 0
        %2107 = vmatprep.subr.bf16.mxu0 0
        %2108 = vmatpush1.bf16.msra.mxu0 0
        %2109 = vmatprep.subr.bf16.mxu0 0
        %2110 = vmatpush1.bf16.msra.mxu0 0
        %2111 = vmatprep.mubr.bf16.mxu0 0
        %2112 = vmatmul.mubr.bf16.gmra.mrb[0].mxu0 %v2077
        %v2113 = vpop.f32.mrb[0].mxu0
        %v2114 = vadd.f32 %v2049, %v2113
        %v2115 = vpop.f32.mrb[0].mxu0
        %v2116 = vpop.f32.mrb[0].mxu0
        %v2117 = vadd.f32 %v2049, %v2116
        %v2118 = vpop.f32.mrb[0].mxu0
        %2119 = vdwg.mxu0
        %v2120 = vadd.f32 %v2114, %v1913
        %v2121 = vadd.f32 %v2117, %v1914
        %2122 = vst.msk [vmem:[#allocation2] sm:$0xff] %vm808, %v2120
        %2123 = vst.msk [vmem:[#allocation2 + $0x8] sm:$0xff] %vm808, %v2121
        %p2124 = scmp.eq.s32.totalorder %s37, 1
        // Predicated region
        $region101: #{tpu_custom_call.1} parent=83 // pred_check
          %p2125 = pneg %p2124
        $region102: #{tpu_custom_call.1} parent=83 // pred_check_branch
          %2127 = sbr.rel (%p2125) target = $region104
        $region103: #{tpu_custom_call.1} parent=83 // pred_region
          %v2128 = vld [vmem:[#allocation2] sm:$0xff]
          %v2129 = vld [vmem:[#allocation2 + $0x8] sm:$0xff]
          %v2130 = vld [vmem:[%s14] sm:$0x1]
          %v2131 = vld [vmem:[%s15] sm:$0x1]
          %v2132 = vsel %vm808, %v2128, 0.0
          %2133 = vadd.xlane.f32.xlu0 %v2132
          %v2134 = vpop.xlane.xlu0 %2133
          %v2135 = vsel %vm808, %v2129, 0.0
          %2136 = vadd.xlane.f32.xlu0 %v2135
          %v2137 = vpop.xlane.xlu0 %2136
          %v2138 = vmul.f32 %v2134, %v815
          %v2139 = vmul.f32 %v2137, %v815
          %v2140 = vmul.f32 %v2128, %v2128
          %v2141 = vmul.f32 %v2129, %v2129
          %v2142 = vsel %vm808, %v2140, 0.0
          %2143 = vadd.xlane.f32.xlu0 %v2142
          %v2144 = vpop.xlane.xlu0 %2143
          %v2145 = vsel %vm808, %v2141, 0.0
          %2146 = vadd.xlane.f32.xlu0 %v2145
          %v2147 = vpop.xlane.xlu0 %2146
          %v2148 = vmul.f32 %v2144, %v815
          %v2149 = vmul.f32 %v2147, %v815
          %v2150 = vmul.f32 %v2138, %v2138
          %v2151 = vmul.f32 %v2139, %v2139
          %v2152 = vsub.f32 %v2148, %v2150
          %v2153 = vsub.f32 %v2149, %v2151
          %v2154 = vmax.f32 %v2152, 0.0
          %v2155 = vmax.f32 %v2153, 0.0
          %v2156 = vsub.f32 %v2128, %v2138
          %v2157 = vsub.f32 %v2129, %v2139
          %v2158 = vadd.f32 %v2154, 1e-06
          %v2159 = vadd.f32 %v2155, 1e-06
          %v2160 = vrsqrt.pop %v2158
          %v2161 = vrsqrt.pop %v2159
          %v2162 = vmul.f32 %v2156, %v2160
          %v2163 = vmul.f32 %v2157, %v2161
          %v2165 = vlaneseq
          %v2166 = vshrl.u32 %v2165, 7
          %v2167 = vsub.s32 0, %v2166
          %v2168 = vrot.slane %v2130, %v2167
          %v2170 = vmul.f32 %v2162, %v2168
          %v2171 = vmul.f32 %v2163, %v2168
          %v2173 = vlaneseq
          %v2174 = vshrl.u32 %v2173, 7
          %v2175 = vsub.s32 0, %v2174
          %v2176 = vrot.slane %v2131, %v2175
          %v2178 = vadd.f32 %v2170, %v2176
          %v2179 = vadd.f32 %v2171, %v2176
          %v2180 = vpack.c.bf16 %v2178, %v2178
          %v2181 = vpack.c.bf16 %v2179, %v2179
          %vm2182 = vcmask 257024
          %2183 = vst.msk [vmem:[#allocation10] sm:$0xf] %vm2182, %v2180
          %2184 = vst.msk [vmem:[#allocation10 + $0x4] sm:$0xf] %vm2182, %v2181
        $region104: #{tpu_custom_call.1} parent=83 // pred_fallthru
          _
        // Predicated region
        $region105: #{tpu_custom_call.1} parent=83 // pred_check
          %p2185 = pneg %p468
        $region106: #{tpu_custom_call.1} parent=83 // pred_check_branch
          %2187 = sbr.rel (%p2185) target = $region108
        $region107: #{tpu_custom_call.1} parent=83 // pred_region
          %s2188 = smul.u32 2, %s36
          %s2190 = ssub.s32 128, 128
          %2191 = vsyncadd [#allocation6], %s2190
          %s2192 = smul.addr %s2188, 64
          %s2193 = scalar_lea.hbm %s16, %s2192
          %s2194 = sshll.u32 [#allocation10], 4
          %s2195 = int_to_ptr.vmem [resolvable:$true] %s2194
          %2200 = dma.vmem_to_hbm [thread:$0]  %s2195, 128, %s2193, [#allocation6], 64, 64, 4
        $region108: #{tpu_custom_call.1} parent=83 // pred_fallthru
          _
        // Predicated region
        $region109: #{tpu_custom_call.1} parent=83 // pred_check
          %p2201 = pneg %p468
        $region110: #{tpu_custom_call.1} parent=83 // pred_check_branch
          %2203 = sbr.rel (%p2201) target = $region112
        $region111: #{tpu_custom_call.1} parent=83 // pred_region
          %2204 = dma.done [#allocation6], 128
        $region112: #{tpu_custom_call.1} parent=83 // pred_fallthru
          _
      $region84: #{tpu_custom_call.1} parent=5 // pred_fallthru
        _
      %p2205 = scmp.le.s32.totalorder 2, %s27
      // Predicated region
      $region113: #{tpu_custom_call.1} parent=5 // pred_check
        %p2206 = pneg %p2205
      $region114: #{tpu_custom_call.1} parent=5 // pred_check_branch
        %2208 = sbr.rel (%p2206) target = $region116
      $region115: #{tpu_custom_call.1} parent=5 // pred_region
        %s2209 = ssub.s32 %s27, 2
      $region116: #{tpu_custom_call.1} parent=5 // pred_fallthru
        _
    $region6: #{tpu_custom_call.1} parent=1 // loop_footer
      %s31 = sadd.s32 1, %s27
    $region7: #{tpu_custom_call.1} parent=1 // loop_footer_branch
      %26 = sbr.rel target = $region3
    $region8: #{tpu_custom_call.1} parent=1 // loop_exit
      _
    %2210 = vsyncpa [#allocation5], 1
    %s2211 = scalar_lea.sflag [#allocation5], 1
    %2212 = vsyncpa %s2211, 1
    %2213 = vsyncpa [#allocation8], 1
    %s2214 = scalar_lea.sflag [#allocation8], 1
    %2215 = vsyncpa %s2214, 1
    %2216 = vsyncpa [#allocation6], 1
    %s2217 = scalar_lea.sflag [#allocation6], 1
    %2218 = vsyncpa %s2217, 1

</llo_original>
